<compile_context>
chip_gen: v7x
topology: tpu7x:2x2x1
jax: 0.10.0
libtpu: 0.0.40
codegen_flags: <defaults>
</compile_context>

<pallas_src>
import numpy as np
import jax
import jax.numpy as jnp
from jax.experimental import pallas as pl
from jax.experimental.pallas import tpu as pltpu

EPS = 1e-5  # BatchNorm eps


# ----------------------------------------------------------------------------
# Pallas kernel: one grid step == (batch element, H tile).  NHWC, C on lanes.
# ----------------------------------------------------------------------------
def _dsconv_kernel(xt_ref, xtop_ref, xbot_ref, dw_ref, pw_ref, pb_ref, out_ref):
    # xt_ref   : (h_tile, W, C_in)       bf16   current H tile (unpadded input)
    # xtop_ref : (1, W, C_in)            bf16   row above the tile (clamped; masked here)
    # xbot_ref : (1, W, C_in)            bf16   row below the tile (clamped; masked here)
    # dw_ref   : (10, C_in)              f32    rows 0..8 folded 3x3 taps, row 9 folded bias
    # pw_ref   : (C_in, C_out_pad)       bf16   folded pointwise weight (lane padded)
    # pb_ref   : (1, C_out_pad)          f32    folded pointwise bias
    # out_ref  : (h_tile, W, C_out_pad)  bf16
    h, w, c_out = out_ref.shape
    c_in = xt_ref.shape[-1]

    ti = pl.program_id(1)
    n_t = pl.num_programs(1)

    taps = dw_ref[...]                                            # (10, C_in) f32

    # Halo rows: the index_map clamps at the image border; mask them to zero here.
    top = jnp.where(ti == 0, jnp.zeros_like(xtop_ref[...]), xtop_ref[...])
    bot = jnp.where(ti == n_t - 1, jnp.zeros_like(xbot_ref[...]), xbot_ref[...])

    # Extended tile with a 1-pixel halo, built entirely in VMEM (no HBM pad pass).
    xe = jnp.concatenate([top, xt_ref[...], bot], axis=0)         # (h+2, W, C_in)
    zcol = jnp.zeros((h + 2, 1, c_in), xe.dtype)
    xe = jnp.concatenate([zcol, xe, zcol], axis=1)                # (h+2, W+2, C_in)

    # Depthwise 3x3 conv: 9 shifted VPU multiply-adds, f32 accumulation.
    # Tap 0 and the folded BN1 bias initialize the accumulator (saves 2 passes).
    acc = xe[0:h, 0:w, :] * taps[0:1, :] + taps[9:10, :]
    for t in range(1, 9):
        oy, ox = divmod(t, 3)
        acc = acc + xe[oy:oy + h, ox:ox + w, :] * taps[t:t + 1, :]

    # ReLU fused with the cast that feeds the MXU (no separate f32 feature copy).
    feat = jnp.maximum(acc, 0.0).astype(pw_ref.dtype)             # (h, w, C_in) bf16

    # Pointwise 1x1 conv (+ folded BN2) as one MXU matmul, bf16 operands / f32 acc.
    o = jnp.dot(feat.reshape(h * w, c_in), pw_ref[...],
                preferred_element_type=jnp.float32)
    o = jnp.maximum(o + pb_ref[...], 0.0)                         # (h*w, C_out_pad)
    out_ref[...] = o.astype(out_ref.dtype).reshape(h, w, c_out)


# ----------------------------------------------------------------------------
# VMEM budgeting helpers (pick the H tile, set an explicit vmem limit)
# ----------------------------------------------------------------------------
def _vmem_footprint_bytes(h_tile, w, c_in, c_out_pad, act_bytes, out_bytes):
    db_in = 2 * (h_tile + 2) * w * c_in * act_bytes        # double-buffered tile + halo rows
    db_out = 2 * h_tile * w * c_out_pad * out_bytes        # double-buffered output
    live = (h_tile + 2) * (w + 2) * c_in * act_bytes       # extended tile copy
    live += h_tile * w * c_in * (4 + act_bytes)            # f32 accumulator + cast feature
    live += h_tile * w * c_out_pad * 4                     # f32 matmul result
    consts = 2 * (10 * c_in * 4 + c_in * c_out_pad * 2 + c_out_pad * 4)
    return db_in + db_out + live + consts


def _pick_h_tile(h, w, c_in, c_out_pad, act_bytes, out_bytes, budget):
    for ht in sorted((d for d in range(1, h + 1) if h % d == 0), reverse=True):
        if _vmem_footprint_bytes(ht, w, c_in, c_out_pad, act_bytes, out_bytes) <= budget:
            return ht
    return 1


# ----------------------------------------------------------------------------
# Host wrappers (parameter folding / layout only; no heavy compute)
# ----------------------------------------------------------------------------
def dsconv_forward_nhwc(x_nhwc, dw_weight, bn1, pw_weight, bn2, *, stride=1,
                        h_tile=None,
                        activations_dtype=jnp.bfloat16,
                        weights_dtype=jnp.bfloat16,
                        out_dtype=jnp.bfloat16,
                        keep_padded_channels=False,
                        vmem_budget_bytes=20 * 1024 * 1024):
    """x_nhwc: (N, H, W, C_in).  Returns (N, H, W, C_out) in `out_dtype`."""
    if stride != 1:
        # TODO(synk): stride=2 depthwise path not implemented (module default is 1).
        raise NotImplementedError("only stride=1 is implemented")

    n, h, w, c_in = x_nhwc.shape
    c_out = pw_weight.shape[0]

    # ---- fold depthwise conv + BN1 (eval()/running-stats semantics) into 9 taps + 1 bias
    g1, b1, m1, v1 = bn1
    s1 = g1 / jnp.sqrt(v1 + EPS)
    taps = jnp.transpose(dw_weight[:, 0, :, :], (1, 2, 0)).reshape(9, c_in) * s1[None, :]
    bias1 = (b1 - s1 * m1)[None, :]
    dw_slab = jnp.concatenate([taps, bias1], axis=0).astype(jnp.float32)      # (10, C_in)

    # ---- fold pointwise conv + BN2 into W (C_in, C_out) + bias (1, C_out)
    g2, b2, m2, v2 = bn2
    s2 = g2 / jnp.sqrt(v2 + EPS)
    w_pw = (pw_weight * s2[:, None]).T.astype(jnp.float32)                    # (C_in, C_out)
    bias2 = (b2 - s2 * m2)[None, :].astype(jnp.float32)                       # (1, C_out)

    # ---- lane-dense output: pad C_out to a multiple of 128.  Zero-padded bias
    # before the ReLU keeps the padded channels exactly zero.
    c_out_pad = ((c_out + 127) // 128) * 128 if c_out % 128 else c_out
    if c_out_pad != c_out:
        w_pw = jnp.pad(w_pw, ((0, 0), (0, c_out_pad - c_out)))
        bias2 = jnp.pad(bias2, ((0, 0), (0, c_out_pad - c_out)))
    pw_slab = w_pw.astype(weights_dtype)                                      # bf16 for the MXU
    pb_slab = bias2                                                           # f32

    # bf16 activations over DMA (halves input read bytes).  In a channels-last
    # bf16 pipeline this cast disappears into the producer.
    x_act = x_nhwc.astype(activations_dtype)
    act_bytes = jnp.dtype(activations_dtype).itemsize
    out_bytes = jnp.dtype(out_dtype).itemsize

    if h_tile is None:
        h_tile = _pick_h_tile(h, w, c_in, c_out_pad, act_bytes, out_bytes, vmem_budget_bytes)
    assert h % h_tile == 0, "h_tile must divide H"
    n_ht = h // h_tile

    fp = _vmem_footprint_bytes(h_tile, w, c_in, c_out_pad, act_bytes, out_bytes)
    vmem_limit = int(min(max(2 * fp, 16 * 1024 * 1024), 48 * 1024 * 1024))

    # Index maps (plain closures over loop-free locals; no late-binding issues).
    def x_tile_map(ni, ti):
        return (ni, ti, 0, 0)

    def x_top_map(ni, ti):  # 1-row block => block index == row index; clamp at top edge
        return (ni, jnp.maximum(ti * h_tile - 1, 0), 0, 0)

    def x_bot_map(ni, ti):  # clamp at bottom edge; masked to zero in-kernel
        return (ni, jnp.minimum((ti + 1) * h_tile, h - 1), 0, 0)

    def const_map(ni, ti):
        return (0, 0)

    out = pl.pallas_call(
        _dsconv_kernel,
        out_shape=jax.ShapeDtypeStruct((n, h, w, c_out_pad), out_dtype),
        grid_spec=pltpu.PrefetchScalarGridSpec(
            num_scalar_prefetch=0,
            grid=(n, n_ht),
            in_specs=[
                pl.BlockSpec((None, h_tile, w, c_in), x_tile_map),
                pl.BlockSpec((None, 1, w, c_in), x_top_map),
                pl.BlockSpec((None, 1, w, c_in), x_bot_map),
                pl.BlockSpec((10, c_in), const_map),
                pl.BlockSpec((c_in, c_out_pad), const_map),
                pl.BlockSpec((1, c_out_pad), const_map),
            ],
            out_specs=pl.BlockSpec((None, h_tile, w, c_out_pad), x_tile_map),
        ),
        compiler_params=pltpu.CompilerParams(
            dimension_semantics=("parallel", "parallel"),
            vmem_limit_bytes=vmem_limit),
    )(x_act, x_act, x_act, dw_slab, pw_slab, pb_slab)

    if not keep_padded_channels and c_out_pad != c_out:
        # TODO(synk): keep the padded bf16 channel layout through the consumer and
        # drop this host-side slice in a fused pipeline.
        out = out[..., :c_out]
    return out


def dsconv_forward(x_nchw, dw_weight, bn1, pw_weight, bn2, *, stride=1, h_tile=None):
    """PyTorch-layout entry: x (N, C_in, H, W) -> (N, C_out, H, W), x.dtype.

    Prefer `dsconv_forward_nhwc` in a channels-last bf16 pipeline to avoid the
    relayout transposes / casts around the kernel.
    """
    x_nhwc = jnp.transpose(x_nchw, (0, 2, 3, 1))
    y = dsconv_forward_nhwc(x_nhwc, dw_weight, bn1, pw_weight, bn2,
                            stride=stride, h_tile=h_tile)
    return jnp.transpose(y, (0, 3, 1, 2)).astype(x_nchw.dtype)


# ----------------------------------------------------------------------------
# Pure-JAX reference (unfolded BN, lax convolutions) for verification
# ----------------------------------------------------------------------------
def reference_forward(x, dw_weight, bn1, pw_weight, bn2, stride=1):
    hi = jax.lax.Precision.HIGHEST
    c_in = x.shape[1]
    y = jax.lax.conv_general_dilated(
        x, dw_weight, window_strides=(stride, stride), padding=((1, 1), (1, 1)),
        dimension_numbers=("NCHW", "OIHW", "NCHW"),
        feature_group_count=c_in, precision=hi)
    g1, b1, m1, v1 = bn1
    y = (g1[None, :, None, None] * (y - m1[None, :, None, None])
         / jnp.sqrt(v1 + EPS)[None, :, None, None] + b1[None, :, None, None])
    y = jnp.maximum(y, 0.0)
    z = jax.lax.conv_general_dilated(
        y, pw_weight[:, :, None, None], window_strides=(1, 1), padding="VALID",
        dimension_numbers=("NCHW", "OIHW", "NCHW"), precision=hi)
    g2, b2, m2, v2 = bn2
    z = (g2[None, :, None, None] * (z - m2[None, :, None, None])
         / jnp.sqrt(v2 + EPS)[None, :, None, None] + b2[None, :, None, None])
    return jnp.maximum(z, 0.0)


# ----------------------------------------------------------------------------
if __name__ == "__main__":
    N, C_IN, C_OUT, H, W = 2, 16, 32, 16, 16

    keys = iter(jax.random.split(jax.random.PRNGKey(0), 12))

    dw_w = jax.random.normal(next(keys), (C_IN, 1, 3, 3), jnp.float32) * 0.3
    g1 = jax.random.uniform(next(keys), (C_IN,), jnp.float32, 0.5, 1.5)
    b1 = jax.random.normal(next(keys), (C_IN,), jnp.float32) * 0.1
    m1 = jax.random.normal(next(keys), (C_IN,), jnp.float32) * 0.1
    v1 = jax.random.uniform(next(keys), (C_IN,), jnp.float32, 0.5, 1.5)

    pw_w = jax.random.normal(next(keys), (C_OUT, C_IN), jnp.float32) * 0.1
    g2 = jax.random.uniform(next(keys), (C_OUT,), jnp.float32, 0.5, 1.5)
    b2 = jax.random.normal(next(keys), (C_OUT,), jnp.float32) * 0.1
    m2 = jax.random.normal(next(keys), (C_OUT,), jnp.float32) * 0.1
    v2 = jax.random.uniform(next(keys), (C_OUT,), jnp.float32, 0.5, 1.5)

    x = jax.random.normal(next(keys), (N, C_IN, H, W), jnp.float32)

    bn1 = (g1, b1, m1, v1)
    bn2 = (g2, b2, m2, v2)

    ref = reference_forward(x, dw_w, bn1, pw_w, bn2)

    # h_tile=8 -> grid (2, 2): exercises the in-kernel H-halo exchange between tiles.
    out = jax.block_until_ready(dsconv_forward(x, dw_w, bn1, pw_w, bn2, h_tile=8))
    assert out.shape == (N, C_OUT, H, W)
    # Tolerance covers bf16 activations / weights / output (all accumulation is f32).
    np.testing.assert_allclose(np.asarray(out, np.float32), np.asarray(ref),
                               rtol=3e-2, atol=3e-2)

    # Auto-picked H tile (whole image per step at these small shapes).
    out2 = jax.block_until_ready(dsconv_forward(x, dw_w, bn1, pw_w, bn2))
    np.testing.assert_allclose(np.asarray(out2, np.float32), np.asarray(ref),
                               rtol=3e-2, atol=3e-2)

    print("KERNEL_OK")
</pallas_src>

<mosaic_0001>
module attributes {stable_mosaic.version = 11 : i64} {
  func.func @_dsconv_kernel(%arg0: i32, %arg1: i32, %arg2: memref<1x8x16x16xbf16, #tpu.memory_space<vmem>>, %arg3: memref<1x1x16x16xbf16, #tpu.memory_space<vmem>>, %arg4: memref<1x1x16x16xbf16, #tpu.memory_space<vmem>>, %arg5: memref<10x16xf32, #tpu.memory_space<vmem>>, %arg6: memref<16x128xbf16, #tpu.memory_space<vmem>>, %arg7: memref<1x128xf32, #tpu.memory_space<vmem>>, %arg8: memref<1x8x16x128xbf16, #tpu.memory_space<vmem>>) attributes {dimension_semantics = [#tpu.dimension_semantics<parallel>, #tpu.dimension_semantics<parallel>], iteration_bounds = array<i64: 2, 2>, scalar_prefetch = 0 : i64, scratch_operands = 0 : i64, tpu.core_type = #tpu.core_type<tc>, window_params = [{transform_indices = @transform_0, window_bounds = array<i64: 1, 8, 16, 16>}, {transform_indices = @transform_1, window_bounds = array<i64: 1, 1, 16, 16>}, {transform_indices = @transform_2, window_bounds = array<i64: 1, 1, 16, 16>}, {pipeline_mode = #tpu.pipeline_mode<synchronous>, transform_indices = @transform_3, window_bounds = array<i64: 10, 16>}, {pipeline_mode = #tpu.pipeline_mode<synchronous>, transform_indices = @transform_4, window_bounds = array<i64: 16, 128>}, {pipeline_mode = #tpu.pipeline_mode<synchronous>, transform_indices = @transform_5, window_bounds = array<i64: 1, 128>}, {transform_indices = @transform_6, window_bounds = array<i64: 1, 8, 16, 128>}]} {
    %c0 = arith.constant 0 : index
    %c0_0 = arith.constant 0 : index
    %0 = vector.load %arg5[%c0, %c0_0] : memref<10x16xf32, #tpu.memory_space<vmem>>, vector<10x16xf32>
    %c0_i32 = arith.constant 0 : i32
    %1 = arith.cmpi eq, %arg1, %c0_i32 : i32
    %cst = arith.constant 0.000000e+00 : bf16
    %2 = vector.broadcast %cst : bf16 to vector<1x16x16xbf16>
    %c0_1 = arith.constant 0 : index
    %c0_2 = arith.constant 0 : index
    %c0_3 = arith.constant 0 : index
    %c0_4 = arith.constant 0 : index
    %3 = vector.load %arg3[%c0_1, %c0_2, %c0_3, %c0_4] : memref<1x1x16x16xbf16, #tpu.memory_space<vmem>>, vector<1x1x16x16xbf16>
    %4 = vector.shape_cast %3 : vector<1x1x16x16xbf16> to vector<1x16x16xbf16>
    %5 = arith.select %1, %2, %4 : vector<1x16x16xbf16>
    %c1_i32 = arith.constant 1 : i32
    %6 = arith.cmpi eq, %arg1, %c1_i32 : i32
    %cst_5 = arith.constant 0.000000e+00 : bf16
    %7 = vector.broadcast %cst_5 : bf16 to vector<1x16x16xbf16>
    %c0_6 = arith.constant 0 : index
    %c0_7 = arith.constant 0 : index
    %c0_8 = arith.constant 0 : index
    %c0_9 = arith.constant 0 : index
    %8 = vector.load %arg4[%c0_6, %c0_7, %c0_8, %c0_9] : memref<1x1x16x16xbf16, #tpu.memory_space<vmem>>, vector<1x1x16x16xbf16>
    %9 = vector.shape_cast %8 : vector<1x1x16x16xbf16> to vector<1x16x16xbf16>
    %10 = arith.select %6, %7, %9 : vector<1x16x16xbf16>
    %c0_10 = arith.constant 0 : index
    %c0_11 = arith.constant 0 : index
    %c0_12 = arith.constant 0 : index
    %c0_13 = arith.constant 0 : index
    %11 = vector.load %arg2[%c0_10, %c0_11, %c0_12, %c0_13] : memref<1x8x16x16xbf16, #tpu.memory_space<vmem>>, vector<1x8x16x16xbf16>
    %12 = vector.shape_cast %11 : vector<1x8x16x16xbf16> to vector<8x16x16xbf16>
    %13 = tpu.concatenate %5, %12, %10 in 0 : vector<1x16x16xbf16>, vector<8x16x16xbf16>, vector<1x16x16xbf16> -> vector<10x16x16xbf16>
    %cst_14 = arith.constant 0.000000e+00 : bf16
    %14 = vector.broadcast %cst_14 : bf16 to vector<10x1x16xbf16>
    %15 = tpu.concatenate %14, %13, %14 in 1 : vector<10x1x16xbf16>, vector<10x16x16xbf16>, vector<10x1x16xbf16> -> vector<10x18x16xbf16>
    %16 = vector.extract_strided_slice %15 {offsets = [0, 0, 0], sizes = [8, 16, 16], strides = [1, 1, 1]} : vector<10x18x16xbf16> to vector<8x16x16xbf16>
    %17 = vector.extract_strided_slice %0 {offsets = [0, 0], sizes = [1, 16], strides = [1, 1]} : vector<10x16xf32> to vector<1x16xf32>
    %18 = arith.extf %16 : vector<8x16x16xbf16> to vector<8x16x16xf32>
    %19 = vector.shape_cast %17 : vector<1x16xf32> to vector<1x1x16xf32>
    %20 = vector.broadcast %19 : vector<1x1x16xf32> to vector<8x16x16xf32>
    %21 = arith.mulf %18, %20 : vector<8x16x16xf32>
    %22 = vector.extract_strided_slice %0 {offsets = [9, 0], sizes = [1, 16], strides = [1, 1]} : vector<10x16xf32> to vector<1x16xf32>
    %23 = vector.shape_cast %22 : vector<1x16xf32> to vector<1x1x16xf32>
    %24 = vector.broadcast %23 : vector<1x1x16xf32> to vector<8x16x16xf32>
    %25 = arith.addf %21, %24 : vector<8x16x16xf32>
    %26 = vector.extract_strided_slice %15 {offsets = [0, 1, 0], sizes = [8, 16, 16], strides = [1, 1, 1]} : vector<10x18x16xbf16> to vector<8x16x16xbf16>
    %27 = vector.extract_strided_slice %0 {offsets = [1, 0], sizes = [1, 16], strides = [1, 1]} : vector<10x16xf32> to vector<1x16xf32>
    %28 = arith.extf %26 : vector<8x16x16xbf16> to vector<8x16x16xf32>
    %29 = vector.shape_cast %27 : vector<1x16xf32> to vector<1x1x16xf32>
    %30 = vector.broadcast %29 : vector<1x1x16xf32> to vector<8x16x16xf32>
    %31 = arith.mulf %28, %30 : vector<8x16x16xf32>
    %32 = arith.addf %25, %31 : vector<8x16x16xf32>
    %33 = vector.extract_strided_slice %15 {offsets = [0, 2, 0], sizes = [8, 16, 16], strides = [1, 1, 1]} : vector<10x18x16xbf16> to vector<8x16x16xbf16>
    %34 = vector.extract_strided_slice %0 {offsets = [2, 0], sizes = [1, 16], strides = [1, 1]} : vector<10x16xf32> to vector<1x16xf32>
    %35 = arith.extf %33 : vector<8x16x16xbf16> to vector<8x16x16xf32>
    %36 = vector.shape_cast %34 : vector<1x16xf32> to vector<1x1x16xf32>
    %37 = vector.broadcast %36 : vector<1x1x16xf32> to vector<8x16x16xf32>
    %38 = arith.mulf %35, %37 : vector<8x16x16xf32>
    %39 = arith.addf %32, %38 : vector<8x16x16xf32>
    %40 = vector.extract_strided_slice %15 {offsets = [1, 0, 0], sizes = [8, 16, 16], strides = [1, 1, 1]} : vector<10x18x16xbf16> to vector<8x16x16xbf16>
    %41 = vector.extract_strided_slice %0 {offsets = [3, 0], sizes = [1, 16], strides = [1, 1]} : vector<10x16xf32> to vector<1x16xf32>
    %42 = arith.extf %40 : vector<8x16x16xbf16> to vector<8x16x16xf32>
    %43 = vector.shape_cast %41 : vector<1x16xf32> to vector<1x1x16xf32>
    %44 = vector.broadcast %43 : vector<1x1x16xf32> to vector<8x16x16xf32>
    %45 = arith.mulf %42, %44 : vector<8x16x16xf32>
    %46 = arith.addf %39, %45 : vector<8x16x16xf32>
    %47 = vector.extract_strided_slice %15 {offsets = [1, 1, 0], sizes = [8, 16, 16], strides = [1, 1, 1]} : vector<10x18x16xbf16> to vector<8x16x16xbf16>
    %48 = vector.extract_strided_slice %0 {offsets = [4, 0], sizes = [1, 16], strides = [1, 1]} : vector<10x16xf32> to vector<1x16xf32>
    %49 = arith.extf %47 : vector<8x16x16xbf16> to vector<8x16x16xf32>
    %50 = vector.shape_cast %48 : vector<1x16xf32> to vector<1x1x16xf32>
    %51 = vector.broadcast %50 : vector<1x1x16xf32> to vector<8x16x16xf32>
    %52 = arith.mulf %49, %51 : vector<8x16x16xf32>
    %53 = arith.addf %46, %52 : vector<8x16x16xf32>
    %54 = vector.extract_strided_slice %15 {offsets = [1, 2, 0], sizes = [8, 16, 16], strides = [1, 1, 1]} : vector<10x18x16xbf16> to vector<8x16x16xbf16>
    %55 = vector.extract_strided_slice %0 {offsets = [5, 0], sizes = [1, 16], strides = [1, 1]} : vector<10x16xf32> to vector<1x16xf32>
    %56 = arith.extf %54 : vector<8x16x16xbf16> to vector<8x16x16xf32>
    %57 = vector.shape_cast %55 : vector<1x16xf32> to vector<1x1x16xf32>
    %58 = vector.broadcast %57 : vector<1x1x16xf32> to vector<8x16x16xf32>
    %59 = arith.mulf %56, %58 : vector<8x16x16xf32>
    %60 = arith.addf %53, %59 : vector<8x16x16xf32>
    %61 = vector.extract_strided_slice %15 {offsets = [2, 0, 0], sizes = [8, 16, 16], strides = [1, 1, 1]} : vector<10x18x16xbf16> to vector<8x16x16xbf16>
    %62 = vector.extract_strided_slice %0 {offsets = [6, 0], sizes = [1, 16], strides = [1, 1]} : vector<10x16xf32> to vector<1x16xf32>
    %63 = arith.extf %61 : vector<8x16x16xbf16> to vector<8x16x16xf32>
    %64 = vector.shape_cast %62 : vector<1x16xf32> to vector<1x1x16xf32>
    %65 = vector.broadcast %64 : vector<1x1x16xf32> to vector<8x16x16xf32>
    %66 = arith.mulf %63, %65 : vector<8x16x16xf32>
    %67 = arith.addf %60, %66 : vector<8x16x16xf32>
    %68 = vector.extract_strided_slice %15 {offsets = [2, 1, 0], sizes = [8, 16, 16], strides = [1, 1, 1]} : vector<10x18x16xbf16> to vector<8x16x16xbf16>
    %69 = vector.extract_strided_slice %0 {offsets = [7, 0], sizes = [1, 16], strides = [1, 1]} : vector<10x16xf32> to vector<1x16xf32>
    %70 = arith.extf %68 : vector<8x16x16xbf16> to vector<8x16x16xf32>
    %71 = vector.shape_cast %69 : vector<1x16xf32> to vector<1x1x16xf32>
    %72 = vector.broadcast %71 : vector<1x1x16xf32> to vector<8x16x16xf32>
    %73 = arith.mulf %70, %72 : vector<8x16x16xf32>
    %74 = arith.addf %67, %73 : vector<8x16x16xf32>
    %75 = vector.extract_strided_slice %15 {offsets = [2, 2, 0], sizes = [8, 16, 16], strides = [1, 1, 1]} : vector<10x18x16xbf16> to vector<8x16x16xbf16>
    %76 = vector.extract_strided_slice %0 {offsets = [8, 0], sizes = [1, 16], strides = [1, 1]} : vector<10x16xf32> to vector<1x16xf32>
    %77 = arith.extf %75 : vector<8x16x16xbf16> to vector<8x16x16xf32>
    %78 = vector.shape_cast %76 : vector<1x16xf32> to vector<1x1x16xf32>
    %79 = vector.broadcast %78 : vector<1x1x16xf32> to vector<8x16x16xf32>
    %80 = arith.mulf %77, %79 : vector<8x16x16xf32>
    %81 = arith.addf %74, %80 : vector<8x16x16xf32>
    %cst_15 = arith.constant 0.000000e+00 : f32
    %82 = vector.broadcast %cst_15 : f32 to vector<8x16x16xf32>
    %83 = arith.maximumf %81, %82 : vector<8x16x16xf32>
    %84 = arith.truncf %83 : vector<8x16x16xf32> to vector<8x16x16xbf16>
    %85 = vector.shape_cast %84 : vector<8x16x16xbf16> to vector<128x16xbf16>
    %c0_16 = arith.constant 0 : index
    %c0_17 = arith.constant 0 : index
    %86 = vector.load %arg6[%c0_16, %c0_17] : memref<16x128xbf16, #tpu.memory_space<vmem>>, vector<16x128xbf16>
    %cst_18 = arith.constant dense<0.000000e+00> : vector<128x128xf32>
    %87 = tpu.matmul %85, %86, %cst_18 {dimension_numbers = #tpu.dot_dimension_numbers<[1], [0], [0], [1], [0, 0, 1, 1], [], []>} : vector<128x16xbf16>, vector<16x128xbf16>, vector<128x128xf32> -> vector<128x128xf32>
    %c0_19 = arith.constant 0 : index
    %c0_20 = arith.constant 0 : index
    %88 = vector.load %arg7[%c0_19, %c0_20] : memref<1x128xf32, #tpu.memory_space<vmem>>, vector<1x128xf32>
    %89 = vector.broadcast %88 : vector<1x128xf32> to vector<128x128xf32>
    %90 = arith.addf %87, %89 : vector<128x128xf32>
    %cst_21 = arith.constant 0.000000e+00 : f32
    %91 = vector.broadcast %cst_21 : f32 to vector<128x128xf32>
    %92 = arith.maximumf %90, %91 : vector<128x128xf32>
    %93 = arith.truncf %92 : vector<128x128xf32> to vector<128x128xbf16>
    %94 = vector.shape_cast %93 : vector<128x128xbf16> to vector<8x16x128xbf16>
    %c0_22 = arith.constant 0 : index
    %c0_23 = arith.constant 0 : index
    %c0_24 = arith.constant 0 : index
    %c0_25 = arith.constant 0 : index
    %95 = vector.load %arg8[%c0_22, %c0_23, %c0_24, %c0_25] : memref<1x8x16x128xbf16, #tpu.memory_space<vmem>>, vector<1x8x16x128xbf16>
    %96 = vector.shape_cast %95 : vector<1x8x16x128xbf16> to vector<8x16x128xbf16>
    %97 = vector.shape_cast %94 : vector<8x16x128xbf16> to vector<1x8x16x128xbf16>
    tpu.vector_store %arg8[%c0_22, %c0_23, %c0_24, %c0_25], %97 {strides = array<i32>} : memref<1x8x16x128xbf16, #tpu.memory_space<vmem>>, vector<1x8x16x128xbf16>,
    return
  }
  func.func @transform_0(%arg0: i32, %arg1: i32) -> (i32, i32, i32, i32) {
    %c0_i32 = arith.constant 0 : i32
    %c0_i32_0 = arith.constant 0 : i32
    %c0_i32_1 = arith.constant 0 : i32
    return %arg0, %arg1, %c0_i32, %c0_i32_0 : i32, i32, i32, i32
  }
  func.func @transform_1(%arg0: i32, %arg1: i32) -> (i32, i32, i32, i32) {
    %c8_i32 = arith.constant 8 : i32
    %0 = arith.muli %arg1, %c8_i32 : i32
    %c1_i32 = arith.constant 1 : i32
    %1 = arith.subi %0, %c1_i32 : i32
    %c0_i32 = arith.constant 0 : i32
    %2 = arith.maxsi %1, %c0_i32 : i32
    %c0_i32_0 = arith.constant 0 : i32
    %c0_i32_1 = arith.constant 0 : i32
    %c0_i32_2 = arith.constant 0 : i32
    return %arg0, %2, %c0_i32_0, %c0_i32_1 : i32, i32, i32, i32
  }
  func.func @transform_2(%arg0: i32, %arg1: i32) -> (i32, i32, i32, i32) {
    %c1_i32 = arith.constant 1 : i32
    %0 = arith.addi %arg1, %c1_i32 : i32
    %c8_i32 = arith.constant 8 : i32
    %1 = arith.muli %0, %c8_i32 : i32
    %c15_i32 = arith.constant 15 : i32
    %2 = arith.minsi %1, %c15_i32 : i32
    %c0_i32 = arith.constant 0 : i32
    %c0_i32_0 = arith.constant 0 : i32
    %c0_i32_1 = arith.constant 0 : i32
    return %arg0, %2, %c0_i32, %c0_i32_0 : i32, i32, i32, i32
  }
  func.func @transform_3(%arg0: i32, %arg1: i32) -> (i32, i32) {
    %c0_i32 = arith.constant 0 : i32
    %c0_i32_0 = arith.constant 0 : i32
    %c0_i32_1 = arith.constant 0 : i32
    return %c0_i32, %c0_i32_0 : i32, i32
  }
  func.func @transform_4(%arg0: i32, %arg1: i32) -> (i32, i32) {
    %c0_i32 = arith.constant 0 : i32
    %c0_i32_0 = arith.constant 0 : i32
    %c0_i32_1 = arith.constant 0 : i32
    return %c0_i32, %c0_i32_0 : i32, i32
  }
  func.func @transform_5(%arg0: i32, %arg1: i32) -> (i32, i32) {
    %c0_i32 = arith.constant 0 : i32
    %c0_i32_0 = arith.constant 0 : i32
    %c0_i32_1 = arith.constant 0 : i32
    return %c0_i32, %c0_i32_0 : i32, i32
  }
  func.func @transform_6(%arg0: i32, %arg1: i32) -> (i32, i32, i32, i32) {
    %c0_i32 = arith.constant 0 : i32
    %c0_i32_0 = arith.constant 0 : i32
    %c0_i32_1 = arith.constant 0 : i32
    return %arg0, %arg1, %c0_i32, %c0_i32_0 : i32, i32, i32, i32
  }
}

</mosaic_0001>

<llo_original>
// kernel: tpu_custom_call.1
$region0: #{tpu_custom_call.1}
  #allocation0 [shape = 'u32[]', space=smem, size = 0x4, offset = 0x4, fixed_abs, tag = 'smem constant byte address 0x4 - core index']
  #allocation1 [shape = 'u32[144,128]{1,0:T(1,128)}', space=vmem, size = 0x12000, scoped, tag = 'internal scratch']
  %s0 = inlined_call_operand.hbm [shape: bf16[2,16,16,16], index: 0, kind: input, shape index: {}]
  %s1 = inlined_call_operand.hbm [shape: bf16[2,16,16,16], index: 1, kind: input, shape index: {}]
  %s2 = inlined_call_operand.hbm [shape: bf16[2,16,16,16], index: 2, kind: input, shape index: {}]
  %s3 = inlined_call_operand.hbm [shape: f32[10,16], index: 3, kind: input, shape index: {}]
  %s4 = inlined_call_operand.vmem [shape: bf16[16,128], index: 4, kind: input, shape index: {}]
  %s5 = inlined_call_operand.vmem [shape: f32[1,128], index: 5, kind: input, shape index: {}]
  %s6 = inlined_call_operand.hbm [shape: bf16[2,16,16,128], index: 6, kind: output, shape index: {}]
  %s7 = sld [smem:[#allocation0]]
  $region73: #{tpu_custom_call.1} parent=0
    _
  %s9 = ssub.s32 1, %s7
  %s10 = scalar_select 0, %s9, %s7
  $region1: #{tpu_custom_call.1} parent=0
    #allocation2 [shape = 'u8[65536]{0}', space=vmem, size = 0x10000, scoped, tag = 'input window, operand 0']
    #allocation3 [shape = 's32[2]{0}', space=sflag, size = 0x8, scoped, tag = 'scoped memory for tpu_custom_call.1']
    #allocation4 [shape = 's32[2]{0}', space=sflag, size = 0x8, scoped, tag = 'scoped memory for tpu_custom_call.1']
    #allocation5 [shape = 'u8[8192]{0}', space=vmem, size = 0x2000, scoped, tag = 'input window, operand 1']
    #allocation6 [shape = 's32[2]{0}', space=sflag, size = 0x8, scoped, tag = 'scoped memory for tpu_custom_call.1']
    #allocation7 [shape = 'u8[8192]{0}', space=vmem, size = 0x2000, scoped, tag = 'input window, operand 2']
    #allocation8 [shape = 'u8[8192]{0}', space=vmem, size = 0x2000, scoped, tag = 'input window, operand 3, single buffered']
    #allocation9 [shape = 's32[1]{0}', space=sflag, size = 0x4, scoped, tag = 'scoped memory for tpu_custom_call.1']
    #allocation10 [shape = 'u8[65536]{0}', space=vmem, size = 0x10000, scoped, tag = 'output window, operand 0']
    %11 = vsyncpa [#allocation3], 0
    %s12 = scalar_lea.sflag [#allocation3], 1
    %13 = vsyncpa %s12, 0
    %14 = vsyncpa [#allocation6], 0
    %s15 = scalar_lea.sflag [#allocation6], 1
    %16 = vsyncpa %s15, 0
    %17 = vsyncpa [#allocation9], 0
    %18 = vsyncpa [#allocation4], 0
    %s19 = scalar_lea.sflag [#allocation4], 1
    %20 = vsyncpa %s19, 0
    loop: start=0, step=1, limit=6
    $region2: #{tpu_custom_call.1} parent=1 // loop_pre_header
      _
    $region3: #{tpu_custom_call.1} parent=1 // loop_header
      %s22 = sphi 0, %s26
      %p23 = scmp.ge.s32.totalorder %s22, 6
      %s29 = sphi 0, %s41
      %s30 = sphi 0, %s37
      %s31 = sphi 0, %s29
      %s32 = sphi 0, %s30
      %s33 = sphi 0, %s31
      %s34 = sphi 0, %s32
      %s46 = sphi 0, %s48
      %s49 = sphi 0, %s46
      %s50 = sphi 0, %s49
      %s66 = sphi 0, %s50
      %s82 = sphi 0, %s84
      %s85 = sphi 0, %s82
      %s86 = sphi 0, %s85
      %s102 = sphi 0, %s86
      %s118 = sphi 0, %s120
      %s121 = sphi 0, %s118
      %s122 = sphi 0, %s121
      %s138 = sphi 0, %s122
      %s142 = sphi 0, %s142
      %s144 = sphi 0, %s142
      %s145 = sphi 0, %s144
      %s159 = sphi 0, %s145
      %s163 = sphi 0, %s163
      %s165 = sphi 0, %s163
      %s166 = sphi 0, %s165
      %s180 = sphi 0, %s166
      %s184 = sphi 0, %s184
      %s186 = sphi 0, %s184
      %s187 = sphi 0, %s186
      %s201 = sphi 0, %s187
      %s209 = sphi 0, %s211
      %s212 = sphi 0, %s209
      %s213 = sphi 0, %s212
      %s229 = sphi 0, %s213
    $region4: #{tpu_custom_call.1} parent=1 // loop_header_branch
      %25 = sbr.rel (%p23) target = $region8
    $region5: #{tpu_custom_call.1} parent=1 // loop_body
      %s27 = ssub.s32 %s22, 1
      %s28 = ssub.s32 %s22, 2
      %s35 = sadd.s32 1, %s30
      %p36 = scmp.ge.s32.totalorder %s35, 2
      %s37 = scalar_select %p36, 0, %s35
      %s38 = sadd.s32 1, %s29
      %s39 = scalar_select %p36, %s38, %s29
      %p40 = scmp.ge.s32.totalorder %s39, 2
      %s41 = scalar_select %p40, 0, %s39
      %s42 = ssub.s32 %s29, %s41
      %s43 = ssub.s32 %s30, %s37
      %s44 = sor.u32 %s42, %s43
      %p45 = scmp.eq.s32.totalorder %s44, 0
      %s47 = sadd.s32 %s46, 1
      %s48 = scalar_select %p45, %s46, %s47
      %p51 = pneg %p45
      %p52 = scmp.eq.s32.totalorder %s22, 3
      %p53 = por %p51, %p52
      %p54 = scmp.ne.s32.totalorder %s46, %s49
      %p55 = scmp.eq.s32.totalorder %s22, 0
      %p56 = por %p54, %p55
      %p57 = scmp.ne.s32.totalorder %s46, %s49
      %p58 = scmp.eq.s32.totalorder %s27, 3
      %p59 = por %p57, %p58
      %p60 = scmp.ne.s32.totalorder %s49, %s50
      %p61 = scmp.eq.s32.totalorder %s27, 0
      %p62 = por %p60, %p61
      %p63 = scmp.ne.s32.totalorder %s49, %s50
      %p64 = scmp.eq.s32.totalorder %s28, 3
      %p65 = por %p63, %p64
      %p67 = scmp.ne.s32.totalorder %s50, %s66
      %p68 = scmp.eq.s32.totalorder %s28, 0
      %p69 = por %p67, %p68
      %s70 = smul.u32 %s30, 8
      %s71 = ssub.s32 %s70, 1
      %p72 = scmp.gt.s32.totalorder %s71, 0
      %s73 = scalar_select %p72, %s71, 0
      %s74 = smul.u32 %s37, 8
      %s75 = ssub.s32 %s74, 1
      %p76 = scmp.gt.s32.totalorder %s75, 0
      %s77 = scalar_select %p76, %s75, 0
      %s78 = ssub.s32 %s29, %s41
      %s79 = ssub.s32 %s73, %s77
      %s80 = sor.u32 %s78, %s79
      %p81 = scmp.eq.s32.totalorder %s80, 0
      %s83 = sadd.s32 %s82, 1
      %s84 = scalar_select %p81, %s82, %s83
      %p87 = pneg %p81
      %p88 = scmp.eq.s32.totalorder %s22, 3
      %p89 = por %p87, %p88
      %p90 = scmp.ne.s32.totalorder %s82, %s85
      %p91 = scmp.eq.s32.totalorder %s22, 0
      %p92 = por %p90, %p91
      %p93 = scmp.ne.s32.totalorder %s82, %s85
      %p94 = scmp.eq.s32.totalorder %s27, 3
      %p95 = por %p93, %p94
      %p96 = scmp.ne.s32.totalorder %s85, %s86
      %p97 = scmp.eq.s32.totalorder %s27, 0
      %p98 = por %p96, %p97
      %p99 = scmp.ne.s32.totalorder %s85, %s86
      %p100 = scmp.eq.s32.totalorder %s28, 3
      %p101 = por %p99, %p100
      %p103 = scmp.ne.s32.totalorder %s86, %s102
      %p104 = scmp.eq.s32.totalorder %s28, 0
      %p105 = por %p103, %p104
      %s106 = sadd.s32 %s30, 1
      %s107 = smul.u32 %s106, 8
      %p108 = scmp.lt.s32.totalorder %s107, 15
      %s109 = scalar_select %p108, %s107, 15
      %s110 = sadd.s32 %s37, 1
      %s111 = smul.u32 %s110, 8
      %p112 = scmp.lt.s32.totalorder %s111, 15
      %s113 = scalar_select %p112, %s111, 15
      %s114 = ssub.s32 %s29, %s41
      %s115 = ssub.s32 %s109, %s113
      %s116 = sor.u32 %s114, %s115
      %p117 = scmp.eq.s32.totalorder %s116, 0
      %s119 = sadd.s32 %s118, 1
      %s120 = scalar_select %p117, %s118, %s119
      %p123 = pneg %p117
      %p124 = scmp.eq.s32.totalorder %s22, 3
      %p125 = por %p123, %p124
      %p126 = scmp.ne.s32.totalorder %s118, %s121
      %p127 = scmp.eq.s32.totalorder %s22, 0
      %p128 = por %p126, %p127
      %p129 = scmp.ne.s32.totalorder %s118, %s121
      %p130 = scmp.eq.s32.totalorder %s27, 3
      %p131 = por %p129, %p130
      %p132 = scmp.ne.s32.totalorder %s121, %s122
      %p133 = scmp.eq.s32.totalorder %s27, 0
      %p134 = por %p132, %p133
      %p135 = scmp.ne.s32.totalorder %s121, %s122
      %p136 = scmp.eq.s32.totalorder %s28, 3
      %p137 = por %p135, %p136
      %p139 = scmp.ne.s32.totalorder %s122, %s138
      %p140 = scmp.eq.s32.totalorder %s28, 0
      %p141 = por %p139, %p140
      %s143 = sadd.s32 %s142, 1
      %p146 = scmp.eq.s32.totalorder %s22, 3
      %p147 = scmp.ne.s32.totalorder %s142, %s144
      %p148 = scmp.eq.s32.totalorder %s22, 0
      %p149 = por %p147, %p148
      %p150 = scmp.ne.s32.totalorder %s142, %s144
      %p151 = scmp.eq.s32.totalorder %s27, 3
      %p152 = por %p150, %p151
      %p153 = scmp.ne.s32.totalorder %s144, %s145
      %p154 = scmp.eq.s32.totalorder %s27, 0
      %p155 = por %p153, %p154
      %p156 = scmp.ne.s32.totalorder %s144, %s145
      %p157 = scmp.eq.s32.totalorder %s28, 3
      %p158 = por %p156, %p157
      %p160 = scmp.ne.s32.totalorder %s145, %s159
      %p161 = scmp.eq.s32.totalorder %s28, 0
      %p162 = por %p160, %p161
      %s164 = sadd.s32 %s163, 1
      %p167 = scmp.eq.s32.totalorder %s22, 3
      %p168 = scmp.ne.s32.totalorder %s163, %s165
      %p169 = scmp.eq.s32.totalorder %s22, 0
      %p170 = por %p168, %p169
      %p171 = scmp.ne.s32.totalorder %s163, %s165
      %p172 = scmp.eq.s32.totalorder %s27, 3
      %p173 = por %p171, %p172
      %p174 = scmp.ne.s32.totalorder %s165, %s166
      %p175 = scmp.eq.s32.totalorder %s27, 0
      %p176 = por %p174, %p175
      %p177 = scmp.ne.s32.totalorder %s165, %s166
      %p178 = scmp.eq.s32.totalorder %s28, 3
      %p179 = por %p177, %p178
      %p181 = scmp.ne.s32.totalorder %s166, %s180
      %p182 = scmp.eq.s32.totalorder %s28, 0
      %p183 = por %p181, %p182
      %s185 = sadd.s32 %s184, 1
      %p188 = scmp.eq.s32.totalorder %s22, 3
      %p189 = scmp.ne.s32.totalorder %s184, %s186
      %p190 = scmp.eq.s32.totalorder %s22, 0
      %p191 = por %p189, %p190
      %p192 = scmp.ne.s32.totalorder %s184, %s186
      %p193 = scmp.eq.s32.totalorder %s27, 3
      %p194 = por %p192, %p193
      %p195 = scmp.ne.s32.totalorder %s186, %s187
      %p196 = scmp.eq.s32.totalorder %s27, 0
      %p197 = por %p195, %p196
      %p198 = scmp.ne.s32.totalorder %s186, %s187
      %p199 = scmp.eq.s32.totalorder %s28, 3
      %p200 = por %p198, %p199
      %p202 = scmp.ne.s32.totalorder %s187, %s201
      %p203 = scmp.eq.s32.totalorder %s28, 0
      %p204 = por %p202, %p203
      %s205 = ssub.s32 %s29, %s41
      %s206 = ssub.s32 %s30, %s37
      %s207 = sor.u32 %s205, %s206
      %p208 = scmp.eq.s32.totalorder %s207, 0
      %s210 = sadd.s32 %s209, 1
      %s211 = scalar_select %p208, %s209, %s210
      %p214 = pneg %p208
      %p215 = scmp.eq.s32.totalorder %s22, 3
      %p216 = por %p214, %p215
      %p217 = scmp.ne.s32.totalorder %s209, %s212
      %p218 = scmp.eq.s32.totalorder %s22, 0
      %p219 = por %p217, %p218
      %p220 = scmp.ne.s32.totalorder %s209, %s212
      %p221 = scmp.eq.s32.totalorder %s27, 3
      %p222 = por %p220, %p221
      %p223 = scmp.ne.s32.totalorder %s212, %s213
      %p224 = scmp.eq.s32.totalorder %s27, 0
      %p225 = por %p223, %p224
      %p226 = scmp.ne.s32.totalorder %s212, %s213
      %p227 = scmp.eq.s32.totalorder %s28, 3
      %p228 = por %p226, %p227
      %p230 = scmp.ne.s32.totalorder %s213, %s229
      %p231 = scmp.eq.s32.totalorder %s28, 0
      %p232 = por %p230, %p231
      %p233 = scmp.le.s32.totalorder 1, %s22
      %p234 = scmp.lt.s32.totalorder %s22, 5
      %p235 = pnand %p233, %p234
      %p236 = pneg %p235
      // Predicated region
      $region9: #{tpu_custom_call.1} parent=5 // pred_check
        _
      $region10: #{tpu_custom_call.1} parent=5 // pred_check_branch
        %238 = sbr.rel (%p235) target = $region12
      $region11: #{tpu_custom_call.1} parent=5 // pred_region
        %s239 = ssub.s32 %s22, 1
        // Predicated region
        $region13: #{tpu_custom_call.1} parent=11 // pred_check
          %p240 = pneg %p155
        $region14: #{tpu_custom_call.1} parent=11 // pred_check_branch
          %242 = sbr.rel (%p240) target = $region16
        $region15: #{tpu_custom_call.1} parent=11 // pred_region
          %s244 = ssub.s32 256, 256
          %245 = vsyncadd [#allocation9], %s244
          %s246 = sshll.u32 [#allocation8], 4
          %s247 = int_to_ptr.vmem [resolvable:$true] %s246
          %252 = dma.hbm_to_vmem [thread:$0]  %s3, 256, %s247, [#allocation9], 128, 128, 8
        $region16: #{tpu_custom_call.1} parent=11 // pred_fallthru
          _
        // Predicated region
        $region17: #{tpu_custom_call.1} parent=11 // pred_check
          %p253 = pneg %p176
        $region18: #{tpu_custom_call.1} parent=11 // pred_check_branch
          %255 = sbr.rel (%p253) target = $region20
        $region19: #{tpu_custom_call.1} parent=11 // pred_region
          _
        $region20: #{tpu_custom_call.1} parent=11 // pred_fallthru
          _
        // Predicated region
        $region21: #{tpu_custom_call.1} parent=11 // pred_check
          %p256 = pneg %p197
        $region22: #{tpu_custom_call.1} parent=11 // pred_check_branch
          %258 = sbr.rel (%p256) target = $region24
        $region23: #{tpu_custom_call.1} parent=11 // pred_region
          _
        $region24: #{tpu_custom_call.1} parent=11 // pred_fallthru
          _
      $region12: #{tpu_custom_call.1} parent=5 // pred_fallthru
        _
      %p259 = scmp.lt.s32.totalorder %s22, 4
      // Predicated region
      $region25: #{tpu_custom_call.1} parent=5 // pred_check
        %p260 = pneg %p259
      $region26: #{tpu_custom_call.1} parent=5 // pred_check_branch
        %262 = sbr.rel (%p260) target = $region28
      $region27: #{tpu_custom_call.1} parent=5 // pred_region
        // Predicated region
        $region29: #{tpu_custom_call.1} parent=27 // pred_check
          %p263 = pneg %p56
        $region30: #{tpu_custom_call.1} parent=27 // pred_check_branch
          %265 = sbr.rel (%p263) target = $region32
        $region31: #{tpu_custom_call.1} parent=27 // pred_region
          %s266 = sand.u32 %s46, 1
          %s267 = scalar_lea.sflag [#allocation3], %s266
          %s268 = sand.u32 %s46, 1
          %s269 = smul.addr %s268, 64
          %s270 = scalar_lea.vmem [#allocation2], %s269
          %s271 = smul.u32 8, %s30
          %s273 = ssub.s32 1024, 1024
          %274 = vsyncadd %s267, %s273
          %s275 = smul.addr %s271, 2
          %s276 = smul.addr %s29, 32
          %s277 = sadd.s32 %s275, %s276
          %s278 = smul.addr %s277, 64
          %s279 = scalar_lea.hbm %s0, %s278
          %s280 = sshll.u32 %s270, 4
          %s281 = int_to_ptr.vmem [resolvable:$true] %s280
          %286 = dma.hbm_to_vmem [thread:$0]  %s279, 1024, %s281, %s267, 64, 64, 4
        $region32: #{tpu_custom_call.1} parent=27 // pred_fallthru
          _
        // Predicated region
        $region33: #{tpu_custom_call.1} parent=27 // pred_check
          %p287 = pneg %p92
        $region34: #{tpu_custom_call.1} parent=27 // pred_check_branch
          %289 = sbr.rel (%p287) target = $region36
        $region35: #{tpu_custom_call.1} parent=27 // pred_region
          %s290 = sand.u32 %s22, 1
          %s291 = scalar_lea.sflag [#allocation6], %s290
          %s292 = sand.u32 %s82, 1
          %s293 = smul.addr %s292, 8
          %s294 = scalar_lea.vmem [#allocation5], %s293
          %s295 = smul.u32 %s30, 8
          %s296 = ssub.s32 %s295, 1
          %p297 = scmp.gt.s32.totalorder %s296, 0
          %s298 = scalar_select %p297, %s296, 0
          %s300 = ssub.s32 128, 128
          %301 = vsyncadd %s291, %s300
          %s302 = smul.addr %s298, 2
          %s303 = smul.addr %s29, 32
          %s304 = sadd.s32 %s302, %s303
          %s305 = smul.addr %s304, 64
          %s306 = scalar_lea.hbm %s1, %s305
          %s307 = sshll.u32 %s294, 4
          %s308 = int_to_ptr.vmem [resolvable:$true] %s307
          %313 = dma.hbm_to_vmem [thread:$0]  %s306, 128, %s308, %s291, 64, 64, 4
        $region36: #{tpu_custom_call.1} parent=27 // pred_fallthru
          _
        // Predicated region
        $region37: #{tpu_custom_call.1} parent=27 // pred_check
          %p314 = pneg %p128
        $region38: #{tpu_custom_call.1} parent=27 // pred_check_branch
          %316 = sbr.rel (%p314) target = $region40
        $region39: #{tpu_custom_call.1} parent=27 // pred_region
          %s317 = sand.u32 %s22, 1
          %s318 = scalar_lea.sflag [#allocation6], %s317
          %s319 = sand.u32 %s118, 1
          %s320 = smul.addr %s319, 8
          %s321 = scalar_lea.vmem [#allocation7], %s320
          %s322 = sadd.s32 %s30, 1
          %s323 = smul.u32 %s322, 8
          %p324 = scmp.lt.s32.totalorder %s323, 15
          %s325 = scalar_select %p324, %s323, 15
          %s327 = ssub.s32 128, 128
          %328 = vsyncadd %s318, %s327
          %s329 = smul.addr %s325, 2
          %s330 = smul.addr %s29, 32
          %s331 = sadd.s32 %s329, %s330
          %s332 = smul.addr %s331, 64
          %s333 = scalar_lea.hbm %s2, %s332
          %s334 = sshll.u32 %s321, 4
          %s335 = int_to_ptr.vmem [resolvable:$true] %s334
          %340 = dma.hbm_to_vmem [thread:$0]  %s333, 128, %s335, %s318, 64, 64, 4
        $region40: #{tpu_custom_call.1} parent=27 // pred_fallthru
          _
      $region28: #{tpu_custom_call.1} parent=5 // pred_fallthru
        _
      %p341 = scmp.le.s32.totalorder 1, %s22
      %p342 = scmp.lt.s32.totalorder %s22, 5
      %p343 = pnand %p341, %p342
      %p344 = pneg %p343
      // Predicated region
      $region41: #{tpu_custom_call.1} parent=5 // pred_check
        _
      $region42: #{tpu_custom_call.1} parent=5 // pred_check_branch
        %346 = sbr.rel (%p343) target = $region44
      $region43: #{tpu_custom_call.1} parent=5 // pred_region
        %s347 = ssub.s32 %s22, 1
        %s348 = sand.u32 %s49, 1
        %s349 = scalar_lea.sflag [#allocation3], %s348
        %s350 = sand.u32 %s49, 1
        %s351 = smul.addr %s350, 64
        %s352 = scalar_lea.vmem [#allocation2], %s351
        // Predicated region
        $region45: #{tpu_custom_call.1} parent=43 // pred_check
          %p353 = pneg %p62
        $region46: #{tpu_custom_call.1} parent=43 // pred_check_branch
          %355 = sbr.rel (%p353) target = $region48
        $region47: #{tpu_custom_call.1} parent=43 // pred_region
          %356 = dma.done %s349, 1024
        $region48: #{tpu_custom_call.1} parent=43 // pred_fallthru
          _
        %s357 = sand.u32 %s27, 1
        %s358 = scalar_lea.sflag [#allocation6], %s357
        %s359 = sand.u32 %s85, 1
        %s360 = smul.addr %s359, 8
        %s361 = scalar_lea.vmem [#allocation5], %s360
        // Predicated region
        $region49: #{tpu_custom_call.1} parent=43 // pred_check
          %p362 = pneg %p98
        $region50: #{tpu_custom_call.1} parent=43 // pred_check_branch
          %364 = sbr.rel (%p362) target = $region52
        $region51: #{tpu_custom_call.1} parent=43 // pred_region
          %365 = dma.done %s358, 128
        $region52: #{tpu_custom_call.1} parent=43 // pred_fallthru
          _
        %s366 = sand.u32 %s27, 1
        %s367 = scalar_lea.sflag [#allocation6], %s366
        %s368 = sand.u32 %s121, 1
        %s369 = smul.addr %s368, 8
        %s370 = scalar_lea.vmem [#allocation7], %s369
        // Predicated region
        $region53: #{tpu_custom_call.1} parent=43 // pred_check
          %p371 = pneg %p134
        $region54: #{tpu_custom_call.1} parent=43 // pred_check_branch
          %373 = sbr.rel (%p371) target = $region56
        $region55: #{tpu_custom_call.1} parent=43 // pred_region
          %374 = dma.done %s367, 128
        $region56: #{tpu_custom_call.1} parent=43 // pred_fallthru
          _
        // Predicated region
        $region57: #{tpu_custom_call.1} parent=43 // pred_check
          %p375 = pneg %p155
        $region58: #{tpu_custom_call.1} parent=43 // pred_check_branch
          %377 = sbr.rel (%p375) target = $region60
        $region59: #{tpu_custom_call.1} parent=43 // pred_region
          %378 = dma.done [#allocation9], 256
        $region60: #{tpu_custom_call.1} parent=43 // pred_fallthru
          _
        %s379 = sand.u32 %s49, 1
        %s380 = scalar_lea.sflag [#allocation3], %s379
        %s381 = sand.u32 %s49, 1
        %s382 = smul.addr %s381, 64
        %s383 = scalar_lea.vmem [#allocation2], %s382
        %p384 = pneg %p62
        %p385 = pneg %p59
        %s386 = sand.u32 %s27, 1
        %s387 = scalar_lea.sflag [#allocation6], %s386
        %s388 = sand.u32 %s85, 1
        %s389 = smul.addr %s388, 8
        %s390 = scalar_lea.vmem [#allocation5], %s389
        %p391 = pneg %p98
        %p392 = pneg %p95
        %s393 = sand.u32 %s27, 1
        %s394 = scalar_lea.sflag [#allocation6], %s393
        %s395 = sand.u32 %s121, 1
        %s396 = smul.addr %s395, 8
        %s397 = scalar_lea.vmem [#allocation7], %s396
        %p398 = pneg %p134
        %p399 = pneg %p131
        %p400 = pneg %p155
        %p401 = pneg %p152
        %p402 = pneg %p176
        %p403 = pneg %p173
        %p404 = pneg %p197
        %p405 = pneg %p194
        %p406 = pneg %p225
        %p407 = pneg %p222
        %s408 = sand.u32 %s212, 1
        %s409 = scalar_lea.sflag [#allocation4], %s408
        %s410 = sand.u32 %s212, 1
        %s411 = smul.addr %s410, 64
        %s412 = scalar_lea.vmem [#allocation10], %s411
        %s413 = smul.u32 8, %s32
        %s414 = smul.u32 %s32, 8
        %s415 = ssub.s32 %s414, 1
        %p416 = scmp.gt.s32.totalorder %s415, 0
        %s417 = scalar_select %p416, %s415, 0
        %s418 = sadd.s32 %s32, 1
        %s419 = smul.u32 %s418, 8
        %p420 = scmp.lt.s32.totalorder %s419, 15
        %s421 = scalar_select %p420, %s419, 15
        %s422 = smul.u32 8, %s32
        %v424 = vld [vmem:[#allocation8] sm:$0xff]
        %v425 = vld [vmem:[#allocation8 + $0x8] sm:$0x3]
        %p426 = scmp.eq.s32.totalorder %s32, 0
        %v427 = vld [vmem:[%s361] sm:$0xf]
        %v428 = vld [vmem:[%s361 + $0x4] sm:$0xf]
        %s429 = scalar_select %p426, 1, 0
        %v430 = vstv %s429
        %vm431 = vcmp.eq.s32.totalorder %v430, 1
        %v432 = vsel %vm431, 0, %v427
        %v433 = vsel %vm431, 0, %v428
        %p434 = scmp.eq.s32.totalorder %s32, 1
        %v435 = vld [vmem:[%s370] sm:$0xf]
        %v436 = vld [vmem:[%s370 + $0x4] sm:$0xf]
        %s437 = scalar_select %p434, 1, 0
        %v438 = vstv %s437
        %vm439 = vcmp.eq.s32.totalorder %v438, 1
        %v440 = vsel %vm439, 0, %v435
        %v441 = vsel %vm439, 0, %v436
        %v442 = vld [vmem:[%s352] sm:$0xf]
        %v443 = vld [vmem:[%s352 + $0x4] sm:$0xf]
        %v444 = vld [vmem:[%s352 + $0x8] sm:$0xf]
        %v445 = vld [vmem:[%s352 + $0xc] sm:$0xf]
        %v446 = vld [vmem:[%s352 + $0x10] sm:$0xf]
        %v447 = vld [vmem:[%s352 + $0x14] sm:$0xf]
        %v448 = vld [vmem:[%s352 + $0x18] sm:$0xf]
        %v449 = vld [vmem:[%s352 + $0x1c] sm:$0xf]
        %v450 = vld [vmem:[%s352 + $0x20] sm:$0xf]
        %v451 = vld [vmem:[%s352 + $0x24] sm:$0xf]
        %v452 = vld [vmem:[%s352 + $0x28] sm:$0xf]
        %v453 = vld [vmem:[%s352 + $0x2c] sm:$0xf]
        %v454 = vld [vmem:[%s352 + $0x30] sm:$0xf]
        %v455 = vld [vmem:[%s352 + $0x34] sm:$0xf]
        %v456 = vld [vmem:[%s352 + $0x38] sm:$0xf]
        %v457 = vld [vmem:[%s352 + $0x3c] sm:$0xf]
        %v478 = vunpack.c.l.b16 %v432
        %v479 = vunpack.c.l.b16 %v433
        %v480 = vunpack.c.l.b16 %v442
        %v481 = vunpack.c.l.b16 %v443
        %v482 = vunpack.c.l.b16 %v444
        %v483 = vunpack.c.l.b16 %v445
        %v484 = vunpack.c.l.b16 %v446
        %v485 = vunpack.c.l.b16 %v447
        %v486 = vunpack.c.l.b16 %v448
        %v487 = vunpack.c.l.b16 %v449
        %v488 = vunpack.c.l.b16 %v450
        %v489 = vunpack.c.l.b16 %v451
        %v490 = vunpack.c.l.b16 %v452
        %v491 = vunpack.c.l.b16 %v453
        %v492 = vunpack.c.l.b16 %v454
        %v493 = vunpack.c.l.b16 %v455
        %v494 = vunpack.c.l.b16 %v456
        %v495 = vunpack.c.l.b16 %v457
        %v496 = vunpack.c.l.b16 %v440
        %v497 = vunpack.c.l.b16 %v441
        %v498 = vpack.c.b16 %v479, %v478
        %v499 = vpack.c.b16 %v481, %v480
        %v500 = vpack.c.b16 %v483, %v482
        %v501 = vpack.c.b16 %v485, %v484
        %v502 = vpack.c.b16 %v487, %v486
        %v503 = vpack.c.b16 %v489, %v488
        %v504 = vpack.c.b16 %v491, %v490
        %v505 = vpack.c.b16 %v493, %v492
        %v506 = vpack.c.b16 %v495, %v494
        %v507 = vpack.c.b16 %v497, %v496
        %v509 = vshrl.u32 %v498, 16
        %v511 = vrot.slane %v509, 7
        %v512 = vshll.u32 %v498, 16
        %v514 = vor.u32 %v511, %v512
        %v516 = vshrl.u32 %v499, 16
        %v518 = vrot.slane %v516, 7
        %v519 = vshll.u32 %v499, 16
        %v521 = vor.u32 %v518, %v519
        %v523 = vshrl.u32 %v500, 16
        %v525 = vrot.slane %v523, 7
        %v526 = vshll.u32 %v500, 16
        %v528 = vor.u32 %v525, %v526
        %v530 = vshrl.u32 %v501, 16
        %v532 = vrot.slane %v530, 7
        %v533 = vshll.u32 %v501, 16
        %v535 = vor.u32 %v532, %v533
        %v537 = vshrl.u32 %v502, 16
        %v539 = vrot.slane %v537, 7
        %v540 = vshll.u32 %v502, 16
        %v542 = vor.u32 %v539, %v540
        %v544 = vshrl.u32 %v503, 16
        %v546 = vrot.slane %v544, 7
        %v547 = vshll.u32 %v503, 16
        %v549 = vor.u32 %v546, %v547
        %v551 = vshrl.u32 %v504, 16
        %v553 = vrot.slane %v551, 7
        %v554 = vshll.u32 %v504, 16
        %v556 = vor.u32 %v553, %v554
        %v558 = vshrl.u32 %v505, 16
        %v560 = vrot.slane %v558, 7
        %v561 = vshll.u32 %v505, 16
        %v563 = vor.u32 %v560, %v561
        %v565 = vshrl.u32 %v506, 16
        %v567 = vrot.slane %v565, 7
        %v568 = vshll.u32 %v506, 16
        %v570 = vor.u32 %v567, %v568
        %v572 = vshrl.u32 %v507, 16
        %v574 = vrot.slane %v572, 7
        %v575 = vshll.u32 %v507, 16
        %v577 = vor.u32 %v574, %v575
        %vm598 = vcmask 1040384
        %vm599 = vsmask.f32 256
        %vm600 = vmand %vm598, %vm599
        %v601 = vsel %vm600, 0, %v514
        %v602 = vsel %vm600, 0, %v521
        %v603 = vsel %vm600, 0, %v528
        %v604 = vsel %vm600, 0, %v535
        %v605 = vsel %vm600, 0, %v542
        %v606 = vsel %vm600, 0, %v549
        %v607 = vsel %vm600, 0, %v556
        %v608 = vsel %vm600, 0, %v563
        %v609 = vsel %vm600, 0, %v570
        %v610 = vsel %vm600, 0, %v577
        %v611 = vsel %vm600, %v511, 0
        %v612 = vsel %vm600, %v518, 0
        %v613 = vsel %vm600, %v525, 0
        %v614 = vsel %vm600, %v532, 0
        %v615 = vsel %vm600, %v539, 0
        %v616 = vsel %vm600, %v546, 0
        %v617 = vsel %vm600, %v553, 0
        %v618 = vsel %vm600, %v560, 0
        %v619 = vsel %vm600, %v567, 0
        %v620 = vsel %vm600, %v574, 0
        %v621 = vunpack.c.l.bf16 %v601
        %v622 = vunpack.c.h.bf16 %v601
        %v623 = vunpack.c.l.bf16 %v602
        %v624 = vunpack.c.h.bf16 %v602
        %v625 = vunpack.c.l.bf16 %v603
        %v626 = vunpack.c.h.bf16 %v603
        %v627 = vunpack.c.l.bf16 %v604
        %v628 = vunpack.c.h.bf16 %v604
        %v629 = vunpack.c.l.bf16 %v605
        %v630 = vunpack.c.h.bf16 %v605
        %v631 = vunpack.c.l.bf16 %v606
        %v632 = vunpack.c.h.bf16 %v606
        %v633 = vunpack.c.l.bf16 %v607
        %v634 = vunpack.c.h.bf16 %v607
        %v635 = vunpack.c.l.bf16 %v608
        %v636 = vunpack.c.h.bf16 %v608
        %v637 = vlaneseq
        %v638 = vshrl.u32 %v637, 7
        %v639 = vsub.s32 0, %v638
        %v640 = vrot.slane %v424, %v639
        %v641 = vmul.f32 %v621, %v640
        %v642 = vmul.f32 %v622, %v640
        %v643 = vmul.f32 %v623, %v640
        %v644 = vmul.f32 %v624, %v640
        %v645 = vmul.f32 %v625, %v640
        %v646 = vmul.f32 %v626, %v640
        %v647 = vmul.f32 %v627, %v640
        %v648 = vmul.f32 %v628, %v640
        %v649 = vmul.f32 %v629, %v640
        %v650 = vmul.f32 %v630, %v640
        %v651 = vmul.f32 %v631, %v640
        %v652 = vmul.f32 %v632, %v640
        %v653 = vmul.f32 %v633, %v640
        %v654 = vmul.f32 %v634, %v640
        %v655 = vmul.f32 %v635, %v640
        %v656 = vmul.f32 %v636, %v640
        %v657 = vlaneseq
        %v658 = vshrl.u32 %v657, 7
        %v659 = vsub.s32 1, %v658
        %v660 = vrot.slane %v425, %v659
        %v661 = vadd.f32 %v641, %v660
        %v662 = vadd.f32 %v642, %v660
        %v663 = vadd.f32 %v643, %v660
        %v664 = vadd.f32 %v644, %v660
        %v665 = vadd.f32 %v645, %v660
        %v666 = vadd.f32 %v646, %v660
        %v667 = vadd.f32 %v647, %v660
        %v668 = vadd.f32 %v648, %v660
        %v669 = vadd.f32 %v649, %v660
        %v670 = vadd.f32 %v650, %v660
        %v671 = vadd.f32 %v651, %v660
        %v672 = vadd.f32 %v652, %v660
        %v673 = vadd.f32 %v653, %v660
        %v674 = vadd.f32 %v654, %v660
        %v675 = vadd.f32 %v655, %v660
        %v676 = vadd.f32 %v656, %v660
        %v677 = vunpack.c.l.bf16 %v611
        %v678 = vunpack.c.l.bf16 %v612
        %v679 = vunpack.c.l.bf16 %v613
        %v680 = vunpack.c.l.bf16 %v614
        %v681 = vunpack.c.l.bf16 %v615
        %v682 = vunpack.c.l.bf16 %v616
        %v683 = vunpack.c.l.bf16 %v617
        %v684 = vunpack.c.l.bf16 %v618
        %v685 = vlaneseq
        %v686 = vshrl.u32 %v685, 7
        %v687 = vsub.s32 1, %v686
        %v688 = vrot.slane %v424, %v687
        %v689 = vmul.f32 %v621, %v688
        %v690 = vmul.f32 %v622, %v688
        %v691 = vmul.f32 %v677, %v688
        %v692 = vmul.f32 %v623, %v688
        %v693 = vmul.f32 %v624, %v688
        %v694 = vmul.f32 %v678, %v688
        %v695 = vmul.f32 %v625, %v688
        %v696 = vmul.f32 %v626, %v688
        %v697 = vmul.f32 %v679, %v688
        %v698 = vmul.f32 %v627, %v688
        %v699 = vmul.f32 %v628, %v688
        %v700 = vmul.f32 %v680, %v688
        %v701 = vmul.f32 %v629, %v688
        %v702 = vmul.f32 %v630, %v688
        %v703 = vmul.f32 %v681, %v688
        %v704 = vmul.f32 %v631, %v688
        %v705 = vmul.f32 %v632, %v688
        %v706 = vmul.f32 %v682, %v688
        %v707 = vmul.f32 %v633, %v688
        %v708 = vmul.f32 %v634, %v688
        %v709 = vmul.f32 %v683, %v688
        %v710 = vmul.f32 %v635, %v688
        %v711 = vmul.f32 %v636, %v688
        %v712 = vmul.f32 %v684, %v688
        %vm737 = vcmask 1046528
        %v738 = vrot.slane %v689, 1
        %v739 = vrot.slane %v690, 1
        %v740 = vsel %vm737, %v738, %v739
        %v741 = vrot.slane %v691, 1
        %v742 = vsel %vm737, %v739, %v741
        %v743 = vrot.slane %v692, 1
        %v744 = vrot.slane %v693, 1
        %v745 = vsel %vm737, %v743, %v744
        %v746 = vrot.slane %v694, 1
        %v747 = vsel %vm737, %v744, %v746
        %v748 = vrot.slane %v695, 1
        %v749 = vrot.slane %v696, 1
        %v750 = vsel %vm737, %v748, %v749
        %v751 = vrot.slane %v697, 1
        %v752 = vsel %vm737, %v749, %v751
        %v753 = vrot.slane %v698, 1
        %v754 = vrot.slane %v699, 1
        %v755 = vsel %vm737, %v753, %v754
        %v756 = vrot.slane %v700, 1
        %v757 = vsel %vm737, %v754, %v756
        %v758 = vrot.slane %v701, 1
        %v759 = vrot.slane %v702, 1
        %v760 = vsel %vm737, %v758, %v759
        %v761 = vrot.slane %v703, 1
        %v762 = vsel %vm737, %v759, %v761
        %v763 = vrot.slane %v704, 1
        %v764 = vrot.slane %v705, 1
        %v765 = vsel %vm737, %v763, %v764
        %v766 = vrot.slane %v706, 1
        %v767 = vsel %vm737, %v764, %v766
        %v768 = vrot.slane %v707, 1
        %v769 = vrot.slane %v708, 1
        %v770 = vsel %vm737, %v768, %v769
        %v771 = vrot.slane %v709, 1
        %v772 = vsel %vm737, %v769, %v771
        %v773 = vrot.slane %v710, 1
        %v774 = vrot.slane %v711, 1
        %v775 = vsel %vm737, %v773, %v774
        %v776 = vrot.slane %v712, 1
        %v777 = vsel %vm737, %v774, %v776
        %v794 = vadd.f32 %v661, %v740
        %v795 = vadd.f32 %v662, %v742
        %v796 = vadd.f32 %v663, %v745
        %v797 = vadd.f32 %v664, %v747
        %v798 = vadd.f32 %v665, %v750
        %v799 = vadd.f32 %v666, %v752
        %v800 = vadd.f32 %v667, %v755
        %v801 = vadd.f32 %v668, %v757
        %v802 = vadd.f32 %v669, %v760
        %v803 = vadd.f32 %v670, %v762
        %v804 = vadd.f32 %v671, %v765
        %v805 = vadd.f32 %v672, %v767
        %v806 = vadd.f32 %v673, %v770
        %v807 = vadd.f32 %v674, %v772
        %v808 = vadd.f32 %v675, %v775
        %v809 = vadd.f32 %v676, %v777
        %v810 = vlaneseq
        %v811 = vshrl.u32 %v810, 7
        %v812 = vsub.s32 2, %v811
        %v813 = vrot.slane %v424, %v812
        %v814 = vmul.f32 %v621, %v813
        %v815 = vmul.f32 %v622, %v813
        %v816 = vmul.f32 %v677, %v813
        %v817 = vmul.f32 %v623, %v813
        %v818 = vmul.f32 %v624, %v813
        %v819 = vmul.f32 %v678, %v813
        %v820 = vmul.f32 %v625, %v813
        %v821 = vmul.f32 %v626, %v813
        %v822 = vmul.f32 %v679, %v813
        %v823 = vmul.f32 %v627, %v813
        %v824 = vmul.f32 %v628, %v813
        %v825 = vmul.f32 %v680, %v813
        %v826 = vmul.f32 %v629, %v813
        %v827 = vmul.f32 %v630, %v813
        %v828 = vmul.f32 %v681, %v813
        %v829 = vmul.f32 %v631, %v813
        %v830 = vmul.f32 %v632, %v813
        %v831 = vmul.f32 %v682, %v813
        %v832 = vmul.f32 %v633, %v813
        %v833 = vmul.f32 %v634, %v813
        %v834 = vmul.f32 %v683, %v813
        %v835 = vmul.f32 %v635, %v813
        %v836 = vmul.f32 %v636, %v813
        %v837 = vmul.f32 %v684, %v813
        %vm862 = vcmask 1045504
        %v863 = vrot.slane %v814, 2
        %v864 = vrot.slane %v815, 2
        %v865 = vsel %vm862, %v863, %v864
        %v866 = vrot.slane %v816, 2
        %v867 = vsel %vm862, %v864, %v866
        %v868 = vrot.slane %v817, 2
        %v869 = vrot.slane %v818, 2
        %v870 = vsel %vm862, %v868, %v869
        %v871 = vrot.slane %v819, 2
        %v872 = vsel %vm862, %v869, %v871
        %v873 = vrot.slane %v820, 2
        %v874 = vrot.slane %v821, 2
        %v875 = vsel %vm862, %v873, %v874
        %v876 = vrot.slane %v822, 2
        %v877 = vsel %vm862, %v874, %v876
        %v878 = vrot.slane %v823, 2
        %v879 = vrot.slane %v824, 2
        %v880 = vsel %vm862, %v878, %v879
        %v881 = vrot.slane %v825, 2
        %v882 = vsel %vm862, %v879, %v881
        %v883 = vrot.slane %v826, 2
        %v884 = vrot.slane %v827, 2
        %v885 = vsel %vm862, %v883, %v884
        %v886 = vrot.slane %v828, 2
        %v887 = vsel %vm862, %v884, %v886
        %v888 = vrot.slane %v829, 2
        %v889 = vrot.slane %v830, 2
        %v890 = vsel %vm862, %v888, %v889
        %v891 = vrot.slane %v831, 2
        %v892 = vsel %vm862, %v889, %v891
        %v893 = vrot.slane %v832, 2
        %v894 = vrot.slane %v833, 2
        %v895 = vsel %vm862, %v893, %v894
        %v896 = vrot.slane %v834, 2
        %v897 = vsel %vm862, %v894, %v896
        %v898 = vrot.slane %v835, 2
        %v899 = vrot.slane %v836, 2
        %v900 = vsel %vm862, %v898, %v899
        %v901 = vrot.slane %v837, 2
        %v902 = vsel %vm862, %v899, %v901
        %v919 = vadd.f32 %v794, %v865
        %v920 = vadd.f32 %v795, %v867
        %v921 = vadd.f32 %v796, %v870
        %v922 = vadd.f32 %v797, %v872
        %v923 = vadd.f32 %v798, %v875
        %v924 = vadd.f32 %v799, %v877
        %v925 = vadd.f32 %v800, %v880
        %v926 = vadd.f32 %v801, %v882
        %v927 = vadd.f32 %v802, %v885
        %v928 = vadd.f32 %v803, %v887
        %v929 = vadd.f32 %v804, %v890
        %v930 = vadd.f32 %v805, %v892
        %v931 = vadd.f32 %v806, %v895
        %v932 = vadd.f32 %v807, %v897
        %v933 = vadd.f32 %v808, %v900
        %v934 = vadd.f32 %v809, %v902
        %v935 = vunpack.c.l.bf16 %v609
        %v936 = vunpack.c.h.bf16 %v609
        %v937 = vlaneseq
        %v938 = vshrl.u32 %v937, 7
        %v939 = vsub.s32 3, %v938
        %v940 = vrot.slane %v424, %v939
        %v941 = vmul.f32 %v623, %v940
        %v942 = vmul.f32 %v624, %v940
        %v943 = vmul.f32 %v625, %v940
        %v944 = vmul.f32 %v626, %v940
        %v945 = vmul.f32 %v627, %v940
        %v946 = vmul.f32 %v628, %v940
        %v947 = vmul.f32 %v629, %v940
        %v948 = vmul.f32 %v630, %v940
        %v949 = vmul.f32 %v631, %v940
        %v950 = vmul.f32 %v632, %v940
        %v951 = vmul.f32 %v633, %v940
        %v952 = vmul.f32 %v634, %v940
        %v953 = vmul.f32 %v635, %v940
        %v954 = vmul.f32 %v636, %v940
        %v955 = vmul.f32 %v935, %v940
        %v956 = vmul.f32 %v936, %v940
        %v957 = vadd.f32 %v919, %v941
        %v958 = vadd.f32 %v920, %v942
        %v959 = vadd.f32 %v921, %v943
        %v960 = vadd.f32 %v922, %v944
        %v961 = vadd.f32 %v923, %v945
        %v962 = vadd.f32 %v924, %v946
        %v963 = vadd.f32 %v925, %v947
        %v964 = vadd.f32 %v926, %v948
        %v965 = vadd.f32 %v927, %v949
        %v966 = vadd.f32 %v928, %v950
        %v967 = vadd.f32 %v929, %v951
        %v968 = vadd.f32 %v930, %v952
        %v969 = vadd.f32 %v931, %v953
        %v970 = vadd.f32 %v932, %v954
        %v971 = vadd.f32 %v933, %v955
        %v972 = vadd.f32 %v934, %v956
        %v973 = vunpack.c.l.bf16 %v619
        %v974 = vlaneseq
        %v975 = vshrl.u32 %v974, 7
        %v976 = vsub.s32 4, %v975
        %v977 = vrot.slane %v424, %v976
        %v978 = vmul.f32 %v623, %v977
        %v979 = vmul.f32 %v624, %v977
        %v980 = vmul.f32 %v678, %v977
        %v981 = vmul.f32 %v625, %v977
        %v982 = vmul.f32 %v626, %v977
        %v983 = vmul.f32 %v679, %v977
        %v984 = vmul.f32 %v627, %v977
        %v985 = vmul.f32 %v628, %v977
        %v986 = vmul.f32 %v680, %v977
        %v987 = vmul.f32 %v629, %v977
        %v988 = vmul.f32 %v630, %v977
        %v989 = vmul.f32 %v681, %v977
        %v990 = vmul.f32 %v631, %v977
        %v991 = vmul.f32 %v632, %v977
        %v992 = vmul.f32 %v682, %v977
        %v993 = vmul.f32 %v633, %v977
        %v994 = vmul.f32 %v634, %v977
        %v995 = vmul.f32 %v683, %v977
        %v996 = vmul.f32 %v635, %v977
        %v997 = vmul.f32 %v636, %v977
        %v998 = vmul.f32 %v684, %v977
        %v999 = vmul.f32 %v935, %v977
        %v1000 = vmul.f32 %v936, %v977
        %v1001 = vmul.f32 %v973, %v977
        %v1026 = vrot.slane %v978, 1
        %v1027 = vrot.slane %v979, 1
        %v1028 = vsel %vm737, %v1026, %v1027
        %v1029 = vrot.slane %v980, 1
        %v1030 = vsel %vm737, %v1027, %v1029
        %v1031 = vrot.slane %v981, 1
        %v1032 = vrot.slane %v982, 1
        %v1033 = vsel %vm737, %v1031, %v1032
        %v1034 = vrot.slane %v983, 1
        %v1035 = vsel %vm737, %v1032, %v1034
        %v1036 = vrot.slane %v984, 1
        %v1037 = vrot.slane %v985, 1
        %v1038 = vsel %vm737, %v1036, %v1037
        %v1039 = vrot.slane %v986, 1
        %v1040 = vsel %vm737, %v1037, %v1039
        %v1041 = vrot.slane %v987, 1
        %v1042 = vrot.slane %v988, 1
        %v1043 = vsel %vm737, %v1041, %v1042
        %v1044 = vrot.slane %v989, 1
        %v1045 = vsel %vm737, %v1042, %v1044
        %v1046 = vrot.slane %v990, 1
        %v1047 = vrot.slane %v991, 1
        %v1048 = vsel %vm737, %v1046, %v1047
        %v1049 = vrot.slane %v992, 1
        %v1050 = vsel %vm737, %v1047, %v1049
        %v1051 = vrot.slane %v993, 1
        %v1052 = vrot.slane %v994, 1
        %v1053 = vsel %vm737, %v1051, %v1052
        %v1054 = vrot.slane %v995, 1
        %v1055 = vsel %vm737, %v1052, %v1054
        %v1056 = vrot.slane %v996, 1
        %v1057 = vrot.slane %v997, 1
        %v1058 = vsel %vm737, %v1056, %v1057
        %v1059 = vrot.slane %v998, 1
        %v1060 = vsel %vm737, %v1057, %v1059
        %v1061 = vrot.slane %v999, 1
        %v1062 = vrot.slane %v1000, 1
        %v1063 = vsel %vm737, %v1061, %v1062
        %v1064 = vrot.slane %v1001, 1
        %v1065 = vsel %vm737, %v1062, %v1064
        %v1082 = vadd.f32 %v957, %v1028
        %v1083 = vadd.f32 %v958, %v1030
        %v1084 = vadd.f32 %v959, %v1033
        %v1085 = vadd.f32 %v960, %v1035
        %v1086 = vadd.f32 %v961, %v1038
        %v1087 = vadd.f32 %v962, %v1040
        %v1088 = vadd.f32 %v963, %v1043
        %v1089 = vadd.f32 %v964, %v1045
        %v1090 = vadd.f32 %v965, %v1048
        %v1091 = vadd.f32 %v966, %v1050
        %v1092 = vadd.f32 %v967, %v1053
        %v1093 = vadd.f32 %v968, %v1055
        %v1094 = vadd.f32 %v969, %v1058
        %v1095 = vadd.f32 %v970, %v1060
        %v1096 = vadd.f32 %v971, %v1063
        %v1097 = vadd.f32 %v972, %v1065
        %v1098 = vlaneseq
        %v1099 = vshrl.u32 %v1098, 7
        %v1100 = vsub.s32 5, %v1099
        %v1101 = vrot.slane %v424, %v1100
        %v1102 = vmul.f32 %v623, %v1101
        %v1103 = vmul.f32 %v624, %v1101
        %v1104 = vmul.f32 %v678, %v1101
        %v1105 = vmul.f32 %v625, %v1101
        %v1106 = vmul.f32 %v626, %v1101
        %v1107 = vmul.f32 %v679, %v1101
        %v1108 = vmul.f32 %v627, %v1101
        %v1109 = vmul.f32 %v628, %v1101
        %v1110 = vmul.f32 %v680, %v1101
        %v1111 = vmul.f32 %v629, %v1101
        %v1112 = vmul.f32 %v630, %v1101
        %v1113 = vmul.f32 %v681, %v1101
        %v1114 = vmul.f32 %v631, %v1101
        %v1115 = vmul.f32 %v632, %v1101
        %v1116 = vmul.f32 %v682, %v1101
        %v1117 = vmul.f32 %v633, %v1101
        %v1118 = vmul.f32 %v634, %v1101
        %v1119 = vmul.f32 %v683, %v1101
        %v1120 = vmul.f32 %v635, %v1101
        %v1121 = vmul.f32 %v636, %v1101
        %v1122 = vmul.f32 %v684, %v1101
        %v1123 = vmul.f32 %v935, %v1101
        %v1124 = vmul.f32 %v936, %v1101
        %v1125 = vmul.f32 %v973, %v1101
        %v1150 = vrot.slane %v1102, 2
        %v1151 = vrot.slane %v1103, 2
        %v1152 = vsel %vm862, %v1150, %v1151
        %v1153 = vrot.slane %v1104, 2
        %v1154 = vsel %vm862, %v1151, %v1153
        %v1155 = vrot.slane %v1105, 2
        %v1156 = vrot.slane %v1106, 2
        %v1157 = vsel %vm862, %v1155, %v1156
        %v1158 = vrot.slane %v1107, 2
        %v1159 = vsel %vm862, %v1156, %v1158
        %v1160 = vrot.slane %v1108, 2
        %v1161 = vrot.slane %v1109, 2
        %v1162 = vsel %vm862, %v1160, %v1161
        %v1163 = vrot.slane %v1110, 2
        %v1164 = vsel %vm862, %v1161, %v1163
        %v1165 = vrot.slane %v1111, 2
        %v1166 = vrot.slane %v1112, 2
        %v1167 = vsel %vm862, %v1165, %v1166
        %v1168 = vrot.slane %v1113, 2
        %v1169 = vsel %vm862, %v1166, %v1168
        %v1170 = vrot.slane %v1114, 2
        %v1171 = vrot.slane %v1115, 2
        %v1172 = vsel %vm862, %v1170, %v1171
        %v1173 = vrot.slane %v1116, 2
        %v1174 = vsel %vm862, %v1171, %v1173
        %v1175 = vrot.slane %v1117, 2
        %v1176 = vrot.slane %v1118, 2
        %v1177 = vsel %vm862, %v1175, %v1176
        %v1178 = vrot.slane %v1119, 2
        %v1179 = vsel %vm862, %v1176, %v1178
        %v1180 = vrot.slane %v1120, 2
        %v1181 = vrot.slane %v1121, 2
        %v1182 = vsel %vm862, %v1180, %v1181
        %v1183 = vrot.slane %v1122, 2
        %v1184 = vsel %vm862, %v1181, %v1183
        %v1185 = vrot.slane %v1123, 2
        %v1186 = vrot.slane %v1124, 2
        %v1187 = vsel %vm862, %v1185, %v1186
        %v1188 = vrot.slane %v1125, 2
        %v1189 = vsel %vm862, %v1186, %v1188
        %v1206 = vadd.f32 %v1082, %v1152
        %v1207 = vadd.f32 %v1083, %v1154
        %v1208 = vadd.f32 %v1084, %v1157
        %v1209 = vadd.f32 %v1085, %v1159
        %v1210 = vadd.f32 %v1086, %v1162
        %v1211 = vadd.f32 %v1087, %v1164
        %v1212 = vadd.f32 %v1088, %v1167
        %v1213 = vadd.f32 %v1089, %v1169
        %v1214 = vadd.f32 %v1090, %v1172
        %v1215 = vadd.f32 %v1091, %v1174
        %v1216 = vadd.f32 %v1092, %v1177
        %v1217 = vadd.f32 %v1093, %v1179
        %v1218 = vadd.f32 %v1094, %v1182
        %v1219 = vadd.f32 %v1095, %v1184
        %v1220 = vadd.f32 %v1096, %v1187
        %v1221 = vadd.f32 %v1097, %v1189
        %v1222 = vunpack.c.l.bf16 %v610
        %v1223 = vunpack.c.h.bf16 %v610
        %v1224 = vlaneseq
        %v1225 = vshrl.u32 %v1224, 7
        %v1226 = vsub.s32 6, %v1225
        %v1227 = vrot.slane %v424, %v1226
        %v1228 = vmul.f32 %v625, %v1227
        %v1229 = vmul.f32 %v626, %v1227
        %v1230 = vmul.f32 %v627, %v1227
        %v1231 = vmul.f32 %v628, %v1227
        %v1232 = vmul.f32 %v629, %v1227
        %v1233 = vmul.f32 %v630, %v1227
        %v1234 = vmul.f32 %v631, %v1227
        %v1235 = vmul.f32 %v632, %v1227
        %v1236 = vmul.f32 %v633, %v1227
        %v1237 = vmul.f32 %v634, %v1227
        %v1238 = vmul.f32 %v635, %v1227
        %v1239 = vmul.f32 %v636, %v1227
        %v1240 = vmul.f32 %v935, %v1227
        %v1241 = vmul.f32 %v936, %v1227
        %v1242 = vmul.f32 %v1222, %v1227
        %v1243 = vmul.f32 %v1223, %v1227
        %v1244 = vadd.f32 %v1206, %v1228
        %v1245 = vadd.f32 %v1207, %v1229
        %v1246 = vadd.f32 %v1208, %v1230
        %v1247 = vadd.f32 %v1209, %v1231
        %v1248 = vadd.f32 %v1210, %v1232
        %v1249 = vadd.f32 %v1211, %v1233
        %v1250 = vadd.f32 %v1212, %v1234
        %v1251 = vadd.f32 %v1213, %v1235
        %v1252 = vadd.f32 %v1214, %v1236
        %v1253 = vadd.f32 %v1215, %v1237
        %v1254 = vadd.f32 %v1216, %v1238
        %v1255 = vadd.f32 %v1217, %v1239
        %v1256 = vadd.f32 %v1218, %v1240
        %v1257 = vadd.f32 %v1219, %v1241
        %v1258 = vadd.f32 %v1220, %v1242
        %v1259 = vadd.f32 %v1221, %v1243
        %v1260 = vunpack.c.l.bf16 %v620
        %v1261 = vlaneseq
        %v1262 = vshrl.u32 %v1261, 7
        %v1263 = vsub.s32 7, %v1262
        %v1264 = vrot.slane %v424, %v1263
        %v1265 = vmul.f32 %v625, %v1264
        %v1266 = vmul.f32 %v626, %v1264
        %v1267 = vmul.f32 %v679, %v1264
        %v1268 = vmul.f32 %v627, %v1264
        %v1269 = vmul.f32 %v628, %v1264
        %v1270 = vmul.f32 %v680, %v1264
        %v1271 = vmul.f32 %v629, %v1264
        %v1272 = vmul.f32 %v630, %v1264
        %v1273 = vmul.f32 %v681, %v1264
        %v1274 = vmul.f32 %v631, %v1264
        %v1275 = vmul.f32 %v632, %v1264
        %v1276 = vmul.f32 %v682, %v1264
        %v1277 = vmul.f32 %v633, %v1264
        %v1278 = vmul.f32 %v634, %v1264
        %v1279 = vmul.f32 %v683, %v1264
        %v1280 = vmul.f32 %v635, %v1264
        %v1281 = vmul.f32 %v636, %v1264
        %v1282 = vmul.f32 %v684, %v1264
        %v1283 = vmul.f32 %v935, %v1264
        %v1284 = vmul.f32 %v936, %v1264
        %v1285 = vmul.f32 %v973, %v1264
        %v1286 = vmul.f32 %v1222, %v1264
        %v1287 = vmul.f32 %v1223, %v1264
        %v1288 = vmul.f32 %v1260, %v1264
        %v1313 = vrot.slane %v1265, 1
        %v1314 = vrot.slane %v1266, 1
        %v1315 = vsel %vm737, %v1313, %v1314
        %v1316 = vrot.slane %v1267, 1
        %v1317 = vsel %vm737, %v1314, %v1316
        %v1318 = vrot.slane %v1268, 1
        %v1319 = vrot.slane %v1269, 1
        %v1320 = vsel %vm737, %v1318, %v1319
        %v1321 = vrot.slane %v1270, 1
        %v1322 = vsel %vm737, %v1319, %v1321
        %v1323 = vrot.slane %v1271, 1
        %v1324 = vrot.slane %v1272, 1
        %v1325 = vsel %vm737, %v1323, %v1324
        %v1326 = vrot.slane %v1273, 1
        %v1327 = vsel %vm737, %v1324, %v1326
        %v1328 = vrot.slane %v1274, 1
        %v1329 = vrot.slane %v1275, 1
        %v1330 = vsel %vm737, %v1328, %v1329
        %v1331 = vrot.slane %v1276, 1
        %v1332 = vsel %vm737, %v1329, %v1331
        %v1333 = vrot.slane %v1277, 1
        %v1334 = vrot.slane %v1278, 1
        %v1335 = vsel %vm737, %v1333, %v1334
        %v1336 = vrot.slane %v1279, 1
        %v1337 = vsel %vm737, %v1334, %v1336
        %v1338 = vrot.slane %v1280, 1
        %v1339 = vrot.slane %v1281, 1
        %v1340 = vsel %vm737, %v1338, %v1339
        %v1341 = vrot.slane %v1282, 1
        %v1342 = vsel %vm737, %v1339, %v1341
        %v1343 = vrot.slane %v1283, 1
        %v1344 = vrot.slane %v1284, 1
        %v1345 = vsel %vm737, %v1343, %v1344
        %v1346 = vrot.slane %v1285, 1
        %v1347 = vsel %vm737, %v1344, %v1346
        %v1348 = vrot.slane %v1286, 1
        %v1349 = vrot.slane %v1287, 1
        %v1350 = vsel %vm737, %v1348, %v1349
        %v1351 = vrot.slane %v1288, 1
        %v1352 = vsel %vm737, %v1349, %v1351
        %v1369 = vadd.f32 %v1244, %v1315
        %v1370 = vadd.f32 %v1245, %v1317
        %v1371 = vadd.f32 %v1246, %v1320
        %v1372 = vadd.f32 %v1247, %v1322
        %v1373 = vadd.f32 %v1248, %v1325
        %v1374 = vadd.f32 %v1249, %v1327
        %v1375 = vadd.f32 %v1250, %v1330
        %v1376 = vadd.f32 %v1251, %v1332
        %v1377 = vadd.f32 %v1252, %v1335
        %v1378 = vadd.f32 %v1253, %v1337
        %v1379 = vadd.f32 %v1254, %v1340
        %v1380 = vadd.f32 %v1255, %v1342
        %v1381 = vadd.f32 %v1256, %v1345
        %v1382 = vadd.f32 %v1257, %v1347
        %v1383 = vadd.f32 %v1258, %v1350
        %v1384 = vadd.f32 %v1259, %v1352
        %v1385 = vlaneseq
        %v1386 = vshrl.u32 %v1385, 7
        %v1387 = vsub.s32 0, %v1386
        %v1388 = vrot.slane %v425, %v1387
        %v1389 = vmul.f32 %v625, %v1388
        %v1390 = vmul.f32 %v626, %v1388
        %v1391 = vmul.f32 %v679, %v1388
        %v1392 = vmul.f32 %v627, %v1388
        %v1393 = vmul.f32 %v628, %v1388
        %v1394 = vmul.f32 %v680, %v1388
        %v1395 = vmul.f32 %v629, %v1388
        %v1396 = vmul.f32 %v630, %v1388
        %v1397 = vmul.f32 %v681, %v1388
        %v1398 = vmul.f32 %v631, %v1388
        %v1399 = vmul.f32 %v632, %v1388
        %v1400 = vmul.f32 %v682, %v1388
        %v1401 = vmul.f32 %v633, %v1388
        %v1402 = vmul.f32 %v634, %v1388
        %v1403 = vmul.f32 %v683, %v1388
        %v1404 = vmul.f32 %v635, %v1388
        %v1405 = vmul.f32 %v636, %v1388
        %v1406 = vmul.f32 %v684, %v1388
        %v1407 = vmul.f32 %v935, %v1388
        %v1408 = vmul.f32 %v936, %v1388
        %v1409 = vmul.f32 %v973, %v1388
        %v1410 = vmul.f32 %v1222, %v1388
        %v1411 = vmul.f32 %v1223, %v1388
        %v1412 = vmul.f32 %v1260, %v1388
        %v1437 = vrot.slane %v1389, 2
        %v1438 = vrot.slane %v1390, 2
        %v1439 = vsel %vm862, %v1437, %v1438
        %v1440 = vrot.slane %v1391, 2
        %v1441 = vsel %vm862, %v1438, %v1440
        %v1442 = vrot.slane %v1392, 2
        %v1443 = vrot.slane %v1393, 2
        %v1444 = vsel %vm862, %v1442, %v1443
        %v1445 = vrot.slane %v1394, 2
        %v1446 = vsel %vm862, %v1443, %v1445
        %v1447 = vrot.slane %v1395, 2
        %v1448 = vrot.slane %v1396, 2
        %v1449 = vsel %vm862, %v1447, %v1448
        %v1450 = vrot.slane %v1397, 2
        %v1451 = vsel %vm862, %v1448, %v1450
        %v1452 = vrot.slane %v1398, 2
        %v1453 = vrot.slane %v1399, 2
        %v1454 = vsel %vm862, %v1452, %v1453
        %v1455 = vrot.slane %v1400, 2
        %v1456 = vsel %vm862, %v1453, %v1455
        %v1457 = vrot.slane %v1401, 2
        %v1458 = vrot.slane %v1402, 2
        %v1459 = vsel %vm862, %v1457, %v1458
        %v1460 = vrot.slane %v1403, 2
        %v1461 = vsel %vm862, %v1458, %v1460
        %v1462 = vrot.slane %v1404, 2
        %v1463 = vrot.slane %v1405, 2
        %v1464 = vsel %vm862, %v1462, %v1463
        %v1465 = vrot.slane %v1406, 2
        %v1466 = vsel %vm862, %v1463, %v1465
        %v1467 = vrot.slane %v1407, 2
        %v1468 = vrot.slane %v1408, 2
        %v1469 = vsel %vm862, %v1467, %v1468
        %v1470 = vrot.slane %v1409, 2
        %v1471 = vsel %vm862, %v1468, %v1470
        %v1472 = vrot.slane %v1410, 2
        %v1473 = vrot.slane %v1411, 2
        %v1474 = vsel %vm862, %v1472, %v1473
        %v1475 = vrot.slane %v1412, 2
        %v1476 = vsel %vm862, %v1473, %v1475
        %v1493 = vadd.f32 %v1369, %v1439
        %v1494 = vadd.f32 %v1370, %v1441
        %v1495 = vadd.f32 %v1371, %v1444
        %v1496 = vadd.f32 %v1372, %v1446
        %v1497 = vadd.f32 %v1373, %v1449
        %v1498 = vadd.f32 %v1374, %v1451
        %v1499 = vadd.f32 %v1375, %v1454
        %v1500 = vadd.f32 %v1376, %v1456
        %v1501 = vadd.f32 %v1377, %v1459
        %v1502 = vadd.f32 %v1378, %v1461
        %v1503 = vadd.f32 %v1379, %v1464
        %v1504 = vadd.f32 %v1380, %v1466
        %v1505 = vadd.f32 %v1381, %v1469
        %v1506 = vadd.f32 %v1382, %v1471
        %v1507 = vadd.f32 %v1383, %v1474
        %v1508 = vadd.f32 %v1384, %v1476
        %v1509 = vmax.f32 %v1493, 0.0
        %v1510 = vmax.f32 %v1494, 0.0
        %v1511 = vmax.f32 %v1495, 0.0
        %v1512 = vmax.f32 %v1496, 0.0
        %v1513 = vmax.f32 %v1497, 0.0
        %v1514 = vmax.f32 %v1498, 0.0
        %v1515 = vmax.f32 %v1499, 0.0
        %v1516 = vmax.f32 %v1500, 0.0
        %v1517 = vmax.f32 %v1501, 0.0
        %v1518 = vmax.f32 %v1502, 0.0
        %v1519 = vmax.f32 %v1503, 0.0
        %v1520 = vmax.f32 %v1504, 0.0
        %v1521 = vmax.f32 %v1505, 0.0
        %v1522 = vmax.f32 %v1506, 0.0
        %v1523 = vmax.f32 %v1507, 0.0
        %v1524 = vmax.f32 %v1508, 0.0
        %v1525 = vpack.c.bf16 %v1510, %v1509
        %v1526 = vpack.c.bf16 %v1512, %v1511
        %v1527 = vpack.c.bf16 %v1514, %v1513
        %v1528 = vpack.c.bf16 %v1516, %v1515
        %v1529 = vpack.c.bf16 %v1518, %v1517
        %v1530 = vpack.c.bf16 %v1520, %v1519
        %v1531 = vpack.c.bf16 %v1522, %v1521
        %v1532 = vpack.c.bf16 %v1524, %v1523
        %v1533 = vld [vmem:[%s4] sm:$0xf]
        %v1534 = vld [vmem:[%s4 + $0x4] sm:$0xf]
        %v1535 = vld [vmem:[%s5] sm:$0x1]
        %v1537 = vlaneseq
        %v1538 = vshrl.u32 %v1537, 7
        %v1539 = vsub.s32 0, %v1538
        %v1540 = vrot.slane %v1535, %v1539
        %v1544 = vunpack.c.l.b16 %v1533
        %v1545 = vunpack.c.l.b16 %v1534
        %v1546 = vpack.c.b16 %v1545, %v1544
        %vm1548 = vcmask 130048
        %v1550 = vsel %vm1548, %v1525, 0
        %v1553 = vsel %vm1548, %v1526, 0
        %v1556 = vsel %vm1548, %v1527, 0
        %v1559 = vsel %vm1548, %v1528, 0
        %v1562 = vsel %vm1548, %v1529, 0
        %v1565 = vsel %vm1548, %v1530, 0
        %v1568 = vsel %vm1548, %v1531, 0
        %v1571 = vsel %vm1548, %v1532, 0
        %1573 = vmatprep.subr.bf16.mxu0 0
        %1574 = vmatpush1.bf16.msra.mxu0 %v1546
        %1575 = vmatprep.subr.bf16.mxu0 0
        %1576 = vmatpush1.bf16.msra.mxu0 0
        %1577 = vmatprep.subr.bf16.mxu0 0
        %1578 = vmatpush1.bf16.msra.mxu0 0
        %1579 = vmatprep.subr.bf16.mxu0 0
        %1580 = vmatpush1.bf16.msra.mxu0 0
        %1581 = vmatprep.subr.bf16.mxu0 0
        %1582 = vmatpush1.bf16.msra.mxu0 0
        %1583 = vmatprep.subr.bf16.mxu0 0
        %1584 = vmatpush1.bf16.msra.mxu0 0
        %1585 = vmatprep.subr.bf16.mxu0 0
        %1586 = vmatpush1.bf16.msra.mxu0 0
        %1587 = vmatprep.subr.bf16.mxu0 0
        %1588 = vmatpush1.bf16.msra.mxu0 0
        %1589 = vmatprep.subr.bf16.mxu0 0
        %1590 = vmatpush1.bf16.msra.mxu0 0
        %1591 = vmatprep.subr.bf16.mxu0 0
        %1592 = vmatpush1.bf16.msra.mxu0 0
        %1593 = vmatprep.subr.bf16.mxu0 0
        %1594 = vmatpush1.bf16.msra.mxu0 0
        %1595 = vmatprep.subr.bf16.mxu0 0
        %1596 = vmatpush1.bf16.msra.mxu0 0
        %1597 = vmatprep.subr.bf16.mxu0 0
        %1598 = vmatpush1.bf16.msra.mxu0 0
        %1599 = vmatprep.subr.bf16.mxu0 0
        %1600 = vmatpush1.bf16.msra.mxu0 0
        %1601 = vmatprep.subr.bf16.mxu0 0
        %1602 = vmatpush1.bf16.msra.mxu0 0
        %1603 = vmatprep.subr.bf16.mxu0 0
        %1604 = vmatpush1.bf16.msra.mxu0 0
        %1605 = vmatprep.mubr.bf16.mxu0 0
        %1606 = vmatmul.mubr.bf16.gmra.mrb[0].mxu0 %v1550
        %v1607 = vpop.f32.mrb[0].mxu0
        %v1608 = vadd.f32 %v1540, %v1607
        %v1609 = vpop.f32.mrb[0].mxu0
        %v1610 = vpop.f32.mrb[0].mxu0
        %v1611 = vadd.f32 %v1540, %v1610
        %v1612 = vpop.f32.mrb[0].mxu0
        %1613 = vmatprep.mubr.bf16.mxu0 0
        %1614 = vmatmul.mubr.bf16.gmra.mrb[0].mxu0 %v1553
        %v1615 = vpop.f32.mrb[0].mxu0
        %v1616 = vadd.f32 %v1540, %v1615
        %v1617 = vpop.f32.mrb[0].mxu0
        %v1618 = vpop.f32.mrb[0].mxu0
        %v1619 = vadd.f32 %v1540, %v1618
        %v1620 = vpop.f32.mrb[0].mxu0
        %1621 = vmatprep.mubr.bf16.mxu0 0
        %1622 = vmatmul.mubr.bf16.gmra.mrb[0].mxu0 %v1556
        %v1623 = vpop.f32.mrb[0].mxu0
        %v1624 = vadd.f32 %v1540, %v1623
        %v1625 = vpop.f32.mrb[0].mxu0
        %v1626 = vpop.f32.mrb[0].mxu0
        %v1627 = vadd.f32 %v1540, %v1626
        %v1628 = vpop.f32.mrb[0].mxu0
        %1629 = vmatprep.mubr.bf16.mxu0 0
        %1630 = vmatmul.mubr.bf16.gmra.mrb[0].mxu0 %v1559
        %v1631 = vpop.f32.mrb[0].mxu0
        %v1632 = vadd.f32 %v1540, %v1631
        %v1633 = vpop.f32.mrb[0].mxu0
        %v1634 = vpop.f32.mrb[0].mxu0
        %v1635 = vadd.f32 %v1540, %v1634
        %v1636 = vpop.f32.mrb[0].mxu0
        %1637 = vmatprep.mubr.bf16.mxu0 0
        %1638 = vmatmul.mubr.bf16.gmra.mrb[0].mxu0 %v1562
        %v1639 = vpop.f32.mrb[0].mxu0
        %v1640 = vadd.f32 %v1540, %v1639
        %v1641 = vpop.f32.mrb[0].mxu0
        %v1642 = vpop.f32.mrb[0].mxu0
        %v1643 = vadd.f32 %v1540, %v1642
        %v1644 = vpop.f32.mrb[0].mxu0
        %1645 = vmatprep.mubr.bf16.mxu0 0
        %1646 = vmatmul.mubr.bf16.gmra.mrb[0].mxu0 %v1565
        %v1647 = vpop.f32.mrb[0].mxu0
        %v1648 = vadd.f32 %v1540, %v1647
        %v1649 = vpop.f32.mrb[0].mxu0
        %v1650 = vpop.f32.mrb[0].mxu0
        %v1651 = vadd.f32 %v1540, %v1650
        %v1652 = vpop.f32.mrb[0].mxu0
        %1653 = vmatprep.mubr.bf16.mxu0 0
        %1654 = vmatmul.mubr.bf16.gmra.mrb[0].mxu0 %v1568
        %v1655 = vpop.f32.mrb[0].mxu0
        %v1656 = vadd.f32 %v1540, %v1655
        %v1657 = vpop.f32.mrb[0].mxu0
        %v1658 = vpop.f32.mrb[0].mxu0
        %v1659 = vadd.f32 %v1540, %v1658
        %v1660 = vpop.f32.mrb[0].mxu0
        %1661 = vmatprep.mubr.bf16.mxu0 0
        %1662 = vmatmul.mubr.bf16.gmra.mrb[0].mxu0 %v1571
        %v1663 = vpop.f32.mrb[0].mxu0
        %v1664 = vadd.f32 %v1540, %v1663
        %v1665 = vpop.f32.mrb[0].mxu0
        %v1666 = vpop.f32.mrb[0].mxu0
        %v1667 = vadd.f32 %v1540, %v1666
        %v1668 = vpop.f32.mrb[0].mxu0
        %1669 = vdwg.mxu0
        %v1670 = vmax.f32 %v1608, 0.0
        %v1671 = vmax.f32 %v1611, 0.0
        %v1672 = vmax.f32 %v1616, 0.0
        %v1673 = vmax.f32 %v1619, 0.0
        %v1674 = vmax.f32 %v1624, 0.0
        %v1675 = vmax.f32 %v1627, 0.0
        %v1676 = vmax.f32 %v1632, 0.0
        %v1677 = vmax.f32 %v1635, 0.0
        %v1678 = vmax.f32 %v1640, 0.0
        %v1679 = vmax.f32 %v1643, 0.0
        %v1680 = vmax.f32 %v1648, 0.0
        %v1681 = vmax.f32 %v1651, 0.0
        %v1682 = vmax.f32 %v1656, 0.0
        %v1683 = vmax.f32 %v1659, 0.0
        %v1684 = vmax.f32 %v1664, 0.0
        %v1685 = vmax.f32 %v1667, 0.0
        %v1686 = vpack.c.bf16 %v1671, %v1670
        %v1687 = vpack.c.bf16 %v1673, %v1672
        %v1688 = vpack.c.bf16 %v1675, %v1674
        %v1689 = vpack.c.bf16 %v1677, %v1676
        %v1690 = vpack.c.bf16 %v1679, %v1678
        %v1691 = vpack.c.bf16 %v1681, %v1680
        %v1692 = vpack.c.bf16 %v1683, %v1682
        %v1693 = vpack.c.bf16 %v1685, %v1684
        %v1702 = vunpack.c.l.b16 %v1686
        %v1703 = vunpack.c.h.b16 %v1686
        %v1704 = vunpack.c.l.b16 %v1687
        %v1705 = vunpack.c.h.b16 %v1687
        %v1706 = vunpack.c.l.b16 %v1688
        %v1707 = vunpack.c.h.b16 %v1688
        %v1708 = vunpack.c.l.b16 %v1689
        %v1709 = vunpack.c.h.b16 %v1689
        %v1710 = vunpack.c.l.b16 %v1690
        %v1711 = vunpack.c.h.b16 %v1690
        %v1712 = vunpack.c.l.b16 %v1691
        %v1713 = vunpack.c.h.b16 %v1691
        %v1714 = vunpack.c.l.b16 %v1692
        %v1715 = vunpack.c.h.b16 %v1692
        %v1716 = vunpack.c.l.b16 %v1693
        %v1717 = vunpack.c.h.b16 %v1693
        %v1718 = vpack.c.b16 %v1702, %v1702
        %v1719 = vpack.c.b16 %v1703, %v1703
        %v1720 = vpack.c.b16 %v1704, %v1704
        %v1721 = vpack.c.b16 %v1705, %v1705
        %v1722 = vpack.c.b16 %v1706, %v1706
        %v1723 = vpack.c.b16 %v1707, %v1707
        %v1724 = vpack.c.b16 %v1708, %v1708
        %v1725 = vpack.c.b16 %v1709, %v1709
        %v1726 = vpack.c.b16 %v1710, %v1710
        %v1727 = vpack.c.b16 %v1711, %v1711
        %v1728 = vpack.c.b16 %v1712, %v1712
        %v1729 = vpack.c.b16 %v1713, %v1713
        %v1730 = vpack.c.b16 %v1714, %v1714
        %v1731 = vpack.c.b16 %v1715, %v1715
        %v1732 = vpack.c.b16 %v1716, %v1716
        %v1733 = vpack.c.b16 %v1717, %v1717
        %1750 = vst [vmem:[%s412] sm:$0xf] %v1718
        %1751 = vst [vmem:[%s412 + $0x4] sm:$0xf] %v1719
        %1752 = vst [vmem:[%s412 + $0x8] sm:$0xf] %v1720
        %1753 = vst [vmem:[%s412 + $0xc] sm:$0xf] %v1721
        %1754 = vst [vmem:[%s412 + $0x10] sm:$0xf] %v1722
        %1755 = vst [vmem:[%s412 + $0x14] sm:$0xf] %v1723
        %1756 = vst [vmem:[%s412 + $0x18] sm:$0xf] %v1724
        %1757 = vst [vmem:[%s412 + $0x1c] sm:$0xf] %v1725
        %1758 = vst [vmem:[%s412 + $0x20] sm:$0xf] %v1726
        %1759 = vst [vmem:[%s412 + $0x24] sm:$0xf] %v1727
        %1760 = vst [vmem:[%s412 + $0x28] sm:$0xf] %v1728
        %1761 = vst [vmem:[%s412 + $0x2c] sm:$0xf] %v1729
        %1762 = vst [vmem:[%s412 + $0x30] sm:$0xf] %v1730
        %1763 = vst [vmem:[%s412 + $0x34] sm:$0xf] %v1731
        %1764 = vst [vmem:[%s412 + $0x38] sm:$0xf] %v1732
        %1765 = vst [vmem:[%s412 + $0x3c] sm:$0xf] %v1733
        %s1766 = sand.u32 %s212, 1
        %s1767 = scalar_lea.sflag [#allocation4], %s1766
        %s1768 = sand.u32 %s212, 1
        %s1769 = smul.addr %s1768, 64
        %s1770 = scalar_lea.vmem [#allocation10], %s1769
        // Predicated region
        $region61: #{tpu_custom_call.1} parent=43 // pred_check
          %p1771 = pneg %p222
        $region62: #{tpu_custom_call.1} parent=43 // pred_check_branch
          %1773 = sbr.rel (%p1771) target = $region64
        $region63: #{tpu_custom_call.1} parent=43 // pred_region
          %s1774 = smul.u32 8, %s32
          %s1776 = ssub.s32 1024, 1024
          %1777 = vsyncadd %s1767, %s1776
          %s1778 = smul.addr %s1774, 2
          %s1779 = smul.addr %s31, 32
          %s1780 = sadd.s32 %s1778, %s1779
          %s1781 = smul.addr %s1780, 64
          %s1782 = scalar_lea.hbm %s6, %s1781
          %s1783 = sshll.u32 %s1770, 4
          %s1784 = int_to_ptr.vmem [resolvable:$true] %s1783
          %1789 = dma.vmem_to_hbm [thread:$0]  %s1784, 1024, %s1782, %s1767, 64, 64, 4
        $region64: #{tpu_custom_call.1} parent=43 // pred_fallthru
          _
      $region44: #{tpu_custom_call.1} parent=5 // pred_fallthru
        _
      %p1790 = scmp.le.s32.totalorder 2, %s22
      // Predicated region
      $region65: #{tpu_custom_call.1} parent=5 // pred_check
        %p1791 = pneg %p1790
      $region66: #{tpu_custom_call.1} parent=5 // pred_check_branch
        %1793 = sbr.rel (%p1791) target = $region68
      $region67: #{tpu_custom_call.1} parent=5 // pred_region
        %s1794 = ssub.s32 %s22, 2
        // Predicated region
        $region69: #{tpu_custom_call.1} parent=67 // pred_check
          %p1795 = pneg %p228
        $region70: #{tpu_custom_call.1} parent=67 // pred_check_branch
          %1797 = sbr.rel (%p1795) target = $region72
        $region71: #{tpu_custom_call.1} parent=67 // pred_region
          %s1798 = sand.u32 %s213, 1
          %s1799 = scalar_lea.sflag [#allocation4], %s1798
          %s1800 = sand.u32 %s213, 1
          %s1801 = smul.addr %s1800, 64
          %s1802 = scalar_lea.vmem [#allocation10], %s1801
          %1803 = dma.done %s1799, 1024
        $region72: #{tpu_custom_call.1} parent=67 // pred_fallthru
          _
      $region68: #{tpu_custom_call.1} parent=5 // pred_fallthru
        _
    $region6: #{tpu_custom_call.1} parent=1 // loop_footer
      %s26 = sadd.s32 1, %s22
    $region7: #{tpu_custom_call.1} parent=1 // loop_footer_branch
      %21 = sbr.rel target = $region3
    $region8: #{tpu_custom_call.1} parent=1 // loop_exit
      _
    %1804 = vsyncpa [#allocation3], 1
    %s1805 = scalar_lea.sflag [#allocation3], 1
    %1806 = vsyncpa %s1805, 1
    %1807 = vsyncpa [#allocation6], 1
    %s1808 = scalar_lea.sflag [#allocation6], 1
    %1809 = vsyncpa %s1808, 1
    %1810 = vsyncpa [#allocation9], 1
    %1811 = vsyncpa [#allocation4], 1
    %s1812 = scalar_lea.sflag [#allocation4], 1
    %1813 = vsyncpa %s1812, 1

</llo_original>
